<compile_context>
chip_gen: v6e
topology: v6e:2x2x1
jax: 0.10.0
libtpu: 0.0.40
codegen_flags: <defaults>
</compile_context>

<pallas_src>
import math

import jax
import jax.numpy as jnp
from jax.experimental import pallas as pl
from jax.experimental.pallas import tpu as pltpu

# ---------------- model hyper-parameters (match the PyTorch module) ----------
INPUT_DIM = 7          # from two_step.py
HIDDEN = 32            # d_model
NUM_HEADS = 4
NUM_LAYERS = 2
DH = HIDDEN // NUM_HEADS
FF = 4 * HIDDEN        # dim_feedforward = hidden_dim * 4
LN_EPS = 1e-5          # nn.LayerNorm default
IN_PAD = 8             # INPUT_DIM padded to one full sublane group

TB_MAX = 4096          # batch tile (lane axis); per-tile VMEM stays < ~4 MiB


def _round_up(n, m):
    return ((n + m - 1) // m) * m


def _choose_tb(batch, tb_max):
    """Lane-axis batch tile: multiple of 128, >=2 tiles when B is large."""
    lane_b = _round_up(max(batch, 1), 128)
    if lane_b <= 256:
        return lane_b
    half = _round_up((lane_b + 1) // 2, 128)   # aim for >= 2 grid points (v7x TCs)
    return max(128, min(tb_max, half))


def _layernorm_t(x, g, b):
    """LayerNorm over the FEATURE axis 0 of a transposed (H, TB) activation.

    One pass: sum and sum-of-squares (biased variance, matches PyTorch)."""
    inv_h = 1.0 / x.shape[0]
    s = jnp.sum(x, axis=0, keepdims=True)          # (1, TB)
    ss = jnp.sum(x * x, axis=0, keepdims=True)     # (1, TB)
    mu = s * inv_h
    var = ss * inv_h - mu * mu
    return (x - mu) * jax.lax.rsqrt(var + LN_EPS) * g + b


# ----------------------------- Pallas kernel ---------------------------------
def transformer_kernel(
    xT_ref,              # (IN_PAD, TB)  f32   x^T, rows >= INPUT_DIM are zero
    w0T_ref,             # (H, IN_PAD)   bf16  (emb_w_pad @ (I + wv0@wo0))^T
    b0_ref,              # (H, 1)        f32   (emb_b @ (I+wv0@wo0) + bv0@wo0 + bo0)^T
    wvoT_ref,            # (L-1, H, H)   bf16  (I + wv@wo)^T for layers 1..L-1
    bvo_ref,             # (L-1, H, 1)   f32
    ln1g_ref, ln1b_ref,  # (L, H, 1)     f32
    ff1wT_ref, ff1b_ref,  # (L, FF, H) bf16, (L, FF, 1) f32
    ff2wT_ref, ff2b_ref,  # (L, H, FF) bf16, (L, H, 1)  f32
    ln2g_ref, ln2b_ref,  # (L, H, 1)     f32
    fcwT_ref,            # (8, H)        bf16  row 0 = fc_w^T, rows 1..7 zero
    fc_b_ref,            # (1, 1)        f32   SMEM scalar
    o_ref,               # (1, TB)       f32   lane-dense output row
):
    f32 = jnp.float32
    bf16 = jnp.bfloat16

    xT = xT_ref[...].astype(bf16)

    def ffn_and_ln2(h, l):
        f = jnp.dot(ff1wT_ref[l], h.astype(bf16),
                    preferred_element_type=f32) + ff1b_ref[l]        # (FF, TB)
        f = jnp.maximum(f, 0.0)
        z = jnp.dot(ff2wT_ref[l], f.astype(bf16),
                    preferred_element_type=f32) + ff2b_ref[l]        # (H, TB)
        return _layernorm_t(h + z, ln2g_ref[l], ln2b_ref[l])

    # ---- layer 0: embedding + attention(value path) + residual, all folded ----
    # seq_len == 1 => softmax == 1, so attn = h@wv@wo + b; residual folded via I.
    z = jnp.dot(w0T_ref[...], xT, preferred_element_type=f32) + b0_ref[...]
    h = _layernorm_t(z, ln1g_ref[0], ln1b_ref[0])
    h = ffn_and_ln2(h, 0)

    # ---- layers 1 .. L-1 (static unroll) ----
    for l in range(1, NUM_LAYERS):
        z = jnp.dot(wvoT_ref[l - 1], h.astype(bf16),
                    preferred_element_type=f32) + bvo_ref[l - 1]
        h = _layernorm_t(z, ln1g_ref[l], ln1b_ref[l])
        h = ffn_and_ln2(h, l)

    # ---- final fc: Linear(H, 1), lane-dense ----
    res = jnp.dot(fcwT_ref[...], h.astype(bf16),
                  preferred_element_type=f32)                        # (8, TB)
    o_ref[...] = res[0:1, :] + fc_b_ref[0, 0]                        # (1, TB)


# ------------------------------ wrapper ---------------------------------------
_KPARAM_ORDER = [
    "w0T", "b0", "wvoT", "bvo",
    "ln1g", "ln1b", "ff1wT", "ff1b", "ff2wT", "ff2b", "ln2g", "ln2b",
    "fcwT", "fc_b",
]


def transformer_forward(x, kparams, *, tb_max=TB_MAX):
    B = x.shape[0]
    x = x.astype(jnp.float32)

    tb = _choose_tb(B, tb_max)
    padded_B = _round_up(max(B, 1), tb)
    num_tiles = padded_B // tb

    # Lane-dense transposed input (IN_PAD, padded_B); padded rows/cols are zero.
    xT = jnp.zeros((IN_PAD, padded_B), jnp.float32).at[:INPUT_DIM, :B].set(x.T)

    L, H = NUM_LAYERS, HIDDEN

    def full(shape):
        # whole-array block, resident across the grid (constant index_map)
        n = len(shape)
        return pl.BlockSpec(shape, lambda i, _n=n: (0,) * _n)

    in_specs = [
        pl.BlockSpec((IN_PAD, tb), lambda i: (0, i)),        # x^T: streamed tiles
        full((H, IN_PAD)), full((H, 1)),                     # layer-0 fused emb+attn
        full((L - 1, H, H)), full((L - 1, H, 1)),            # layers 1.. fused attn
        full((L, H, 1)), full((L, H, 1)),                    # ln1 gamma / beta
        full((L, FF, H)), full((L, FF, 1)),                  # ff1
        full((L, H, FF)), full((L, H, 1)),                   # ff2
        full((L, H, 1)), full((L, H, 1)),                    # ln2 gamma / beta
        full((8, H)),                                        # fc_w^T (sublane pad)
        pl.BlockSpec(memory_space=pltpu.MemorySpace.SMEM),   # fc_b scalar
    ]

    out = pl.pallas_call(
        transformer_kernel,
        out_shape=jax.ShapeDtypeStruct((1, padded_B), jnp.float32),  # lane-dense slab
        grid=(num_tiles,),
        in_specs=in_specs,
        out_specs=pl.BlockSpec((1, tb), lambda i: (0, i)),
        compiler_params=pltpu.CompilerParams(
            dimension_semantics=("parallel",),       # shard batch tiles across TCs
        ),
    )(xT, *[kparams[name] for name in _KPARAM_ORDER])

    return out[0, :B].reshape(B, 1)


# ------------------------ deterministic parameter init ------------------------
def init_params(key):
    ks = jax.random.split(key, 16)

    def w(k, shape, scale=0.1):
        return (scale * jax.random.normal(k, shape)).astype(jnp.float32)

    L, H = NUM_LAYERS, HIDDEN
    p = {
        "emb_w": w(ks[0], (INPUT_DIM, H)),
        "emb_b": w(ks[1], (1, H), 0.01),
        "wq": w(ks[2], (L, H, H)),
        "bq": w(ks[3], (L, 1, H), 0.01),
        "wk": w(ks[4], (L, H, H)),
        "bk": w(ks[5], (L, 1, H), 0.01),
        "wv": w(ks[6], (L, H, H)),
        "bv": w(ks[7], (L, 1, H), 0.01),
        "wo": w(ks[8], (L, H, H)),
        "bo": w(ks[9], (L, 1, H), 0.01),
        "ln1g": jnp.ones((L, 1, H), jnp.float32),
        "ln1b": jnp.zeros((L, 1, H), jnp.float32),
        "ff1w": w(ks[10], (L, H, FF)),
        "ff1b": w(ks[11], (L, 1, FF), 0.01),
        "ff2w": w(ks[12], (L, FF, H)),
        "ff2b": w(ks[13], (L, 1, H), 0.01),
        "ln2g": jnp.ones((L, 1, H), jnp.float32),
        "ln2b": jnp.zeros((L, 1, H), jnp.float32),
        "fc_w": w(ks[14], (H, 1)),
        "fc_b": w(ks[15], (1, 1), 0.01),
    }
    return p


def fuse_params(p):
    """Pre-fuse seq_len==1 attention (+residual, +layer-0 embedding), transpose
    all weights for the (H, TB) activation layout, and cast matmul operands
    to bf16 (biases / LayerNorm params stay f32)."""
    bf16 = jnp.bfloat16
    f32 = jnp.float32
    H = HIDDEN

    eye = jnp.eye(H, dtype=f32)
    # residual-folded value->output projection: wvo' = I + wv @ wo
    wvo = eye[None] + jnp.einsum("lij,ljk->lik", p["wv"], p["wo"])        # (L,H,H)
    bvo = jnp.einsum("lij,ljk->lik", p["bv"], p["wo"]) + p["bo"]          # (L,1,H)

    # layer 0: additionally fold the embedding; pad input dim 7 -> 8.
    emb_w_pad = jnp.zeros((IN_PAD, H), f32).at[:INPUT_DIM].set(p["emb_w"])
    w0 = emb_w_pad @ wvo[0]                          # (IN_PAD, H)
    b0 = p["emb_b"] @ wvo[0] + bvo[0]                # (1, H)

    fcw_row = jnp.zeros((8, H), f32).at[0].set(p["fc_w"][:, 0])

    def t12(a):  # transpose the last two axes of a stacked (L, a, b) array
        return jnp.swapaxes(a, 1, 2)

    return {
        "w0T": w0.T.astype(bf16),                       # (H, IN_PAD)
        "b0": b0.T.astype(f32),                          # (H, 1)
        "wvoT": t12(wvo[1:]).astype(bf16),               # (L-1, H, H)
        "bvo": t12(bvo[1:]).astype(f32),                 # (L-1, H, 1)
        "ln1g": t12(p["ln1g"]).astype(f32),              # (L, H, 1)
        "ln1b": t12(p["ln1b"]).astype(f32),
        "ff1wT": t12(p["ff1w"]).astype(bf16),            # (L, FF, H)
        "ff1b": t12(p["ff1b"]).astype(f32),              # (L, FF, 1)
        "ff2wT": t12(p["ff2w"]).astype(bf16),            # (L, H, FF)
        "ff2b": t12(p["ff2b"]).astype(f32),              # (L, H, 1)
        "ln2g": t12(p["ln2g"]).astype(f32),
        "ln2b": t12(p["ln2b"]).astype(f32),
        "fcwT": fcw_row.astype(bf16),                    # (8, H)
        "fc_b": p["fc_b"].astype(f32),                   # (1, 1) SMEM scalar
    }


# -------------------------- pure-JAX reference (full MHA, f32) ---------------
def _layernorm_ref(x, g, b):
    mu = jnp.mean(x, axis=-1, keepdims=True)
    xc = x - mu
    var = jnp.mean(xc * xc, axis=-1, keepdims=True)
    return xc * jax.lax.rsqrt(var + LN_EPS) * g + b


def ref_forward(x, p):
    B = x.shape[0]
    h = x @ p["emb_w"] + p["emb_b"]          # (B, H)
    h = h[:, None, :]                        # (B, 1, H)  -- seq_len == 1
    for l in range(NUM_LAYERS):
        q = h @ p["wq"][l] + p["bq"][l]
        k = h @ p["wk"][l] + p["bk"][l]
        v = h @ p["wv"][l] + p["bv"][l]
        qh = q.reshape(B, 1, NUM_HEADS, DH).transpose(0, 2, 1, 3)
        kh = k.reshape(B, 1, NUM_HEADS, DH).transpose(0, 2, 1, 3)
        vh = v.reshape(B, 1, NUM_HEADS, DH).transpose(0, 2, 1, 3)
        scores = (qh @ jnp.swapaxes(kh, -1, -2)) / math.sqrt(DH)   # (B, NH, 1, 1)
        attn_w = jax.nn.softmax(scores, axis=-1)
        attn = attn_w @ vh                                          # (B, NH, 1, DH)
        attn = attn.transpose(0, 2, 1, 3).reshape(B, 1, HIDDEN)
        attn = attn @ p["wo"][l] + p["bo"][l]
        h = _layernorm_ref(h + attn, p["ln1g"][l], p["ln1b"][l])
        ff = jnp.maximum(h @ p["ff1w"][l] + p["ff1b"][l], 0.0)
        ff = ff @ p["ff2w"][l] + p["ff2b"][l]
        h = _layernorm_ref(h + ff, p["ln2g"][l], p["ln2b"][l])
    h = h[:, 0, :]
    return h @ p["fc_w"] + p["fc_b"]


if __name__ == "__main__":
    key = jax.random.PRNGKey(0)
    kx, kp = jax.random.split(key)

    B = 8
    x = jax.random.normal(kx, (B, INPUT_DIM), dtype=jnp.float32)
    params = init_params(kp)
    kparams = fuse_params(params)

    out = transformer_forward(x, kparams)
    out = jax.block_until_ready(out)

    ref = ref_forward(x, params)
    assert out.shape == (B, 1), out.shape
    # bf16 matmul operands (f32 accumulation / LayerNorm) vs f32 reference ->
    # loosened tolerance.
    if not bool(jnp.allclose(out, ref, atol=5e-2, rtol=5e-2)):
        raise AssertionError(
            f"Pallas output does not match reference; max abs err = "
            f"{float(jnp.max(jnp.abs(out - ref)))}"
        )
    print("KERNEL_OK")
</pallas_src>

<mosaic_0001>
module attributes {stable_mosaic.version = 11 : i64} {
  func.func @transformer_kernel(%arg0: i32, %arg1: memref<8x128xf32, #tpu.memory_space<vmem>>, %arg2: memref<32x8xbf16, #tpu.memory_space<vmem>>, %arg3: memref<32x1xf32, #tpu.memory_space<vmem>>, %arg4: memref<1x32x32xbf16, #tpu.memory_space<vmem>>, %arg5: memref<1x32x1xf32, #tpu.memory_space<vmem>>, %arg6: memref<2x32x1xf32, #tpu.memory_space<vmem>>, %arg7: memref<2x32x1xf32, #tpu.memory_space<vmem>>, %arg8: memref<2x128x32xbf16, #tpu.memory_space<vmem>>, %arg9: memref<2x128x1xf32, #tpu.memory_space<vmem>>, %arg10: memref<2x32x128xbf16, #tpu.memory_space<vmem>>, %arg11: memref<2x32x1xf32, #tpu.memory_space<vmem>>, %arg12: memref<2x32x1xf32, #tpu.memory_space<vmem>>, %arg13: memref<2x32x1xf32, #tpu.memory_space<vmem>>, %arg14: memref<8x32xbf16, #tpu.memory_space<vmem>>, %arg15: memref<1x1xf32, #tpu.memory_space<smem>>, %arg16: memref<1x128xf32, #tpu.memory_space<vmem>>) attributes {dimension_semantics = [#tpu.dimension_semantics<parallel>], iteration_bounds = array<i64: 1>, scalar_prefetch = 0 : i64, scratch_operands = 0 : i64, tpu.core_type = #tpu.core_type<tc>, window_params = [{transform_indices = @transform_0, window_bounds = array<i64: 8, 128>}, {pipeline_mode = #tpu.pipeline_mode<synchronous>, transform_indices = @transform_1, window_bounds = array<i64: 32, 8>}, {pipeline_mode = #tpu.pipeline_mode<synchronous>, transform_indices = @transform_2, window_bounds = array<i64: 32, 1>}, {pipeline_mode = #tpu.pipeline_mode<synchronous>, transform_indices = @transform_3, window_bounds = array<i64: 1, 32, 32>}, {pipeline_mode = #tpu.pipeline_mode<synchronous>, transform_indices = @transform_4, window_bounds = array<i64: 1, 32, 1>}, {pipeline_mode = #tpu.pipeline_mode<synchronous>, transform_indices = @transform_5, window_bounds = array<i64: 2, 32, 1>}, {pipeline_mode = #tpu.pipeline_mode<synchronous>, transform_indices = @transform_6, window_bounds = array<i64: 2, 32, 1>}, {pipeline_mode = #tpu.pipeline_mode<synchronous>, transform_indices = @transform_7, window_bounds = array<i64: 2, 128, 32>}, {pipeline_mode = #tpu.pipeline_mode<synchronous>, transform_indices = @transform_8, window_bounds = array<i64: 2, 128, 1>}, {pipeline_mode = #tpu.pipeline_mode<synchronous>, transform_indices = @transform_9, window_bounds = array<i64: 2, 32, 128>}, {pipeline_mode = #tpu.pipeline_mode<synchronous>, transform_indices = @transform_10, window_bounds = array<i64: 2, 32, 1>}, {pipeline_mode = #tpu.pipeline_mode<synchronous>, transform_indices = @transform_11, window_bounds = array<i64: 2, 32, 1>}, {pipeline_mode = #tpu.pipeline_mode<synchronous>, transform_indices = @transform_12, window_bounds = array<i64: 2, 32, 1>}, {pipeline_mode = #tpu.pipeline_mode<synchronous>, transform_indices = @transform_13, window_bounds = array<i64: 8, 32>}, {transform_indices = @transform_14, window_bounds = array<i64: 1, 1>}, {transform_indices = @transform_15, window_bounds = array<i64: 1, 128>}]} {
    %c0 = arith.constant 0 : index
    %c0_0 = arith.constant 0 : index
    %0 = vector.load %arg1[%c0, %c0_0] : memref<8x128xf32, #tpu.memory_space<vmem>>, vector<8x128xf32>
    %1 = arith.truncf %0 : vector<8x128xf32> to vector<8x128xbf16>
    %c0_1 = arith.constant 0 : index
    %c0_2 = arith.constant 0 : index
    %2 = vector.load %arg2[%c0_1, %c0_2] : memref<32x8xbf16, #tpu.memory_space<vmem>>, vector<32x8xbf16>
    %cst = arith.constant dense<0.000000e+00> : vector<32x128xf32>
    %3 = tpu.matmul %2, %1, %cst {dimension_numbers = #tpu.dot_dimension_numbers<[1], [0], [0], [1], [0, 0, 1, 1], [], []>} : vector<32x8xbf16>, vector<8x128xbf16>, vector<32x128xf32> -> vector<32x128xf32>
    %c0_3 = arith.constant 0 : index
    %c0_4 = arith.constant 0 : index
    %4 = vector.load %arg3[%c0_3, %c0_4] : memref<32x1xf32, #tpu.memory_space<vmem>>, vector<32x1xf32>
    %5 = vector.broadcast %4 : vector<32x1xf32> to vector<32x128xf32>
    %6 = arith.addf %3, %5 : vector<32x128xf32>
    %c0_5 = arith.constant 0 : index
    %c0_6 = arith.constant 0 : index
    %c0_7 = arith.constant 0 : index
    %7 = vector.load %arg6[%c0_5, %c0_6, %c0_7] : memref<2x32x1xf32, #tpu.memory_space<vmem>>, vector<1x32x1xf32>
    %8 = vector.shape_cast %7 : vector<1x32x1xf32> to vector<32x1xf32>
    %c0_8 = arith.constant 0 : index
    %c0_9 = arith.constant 0 : index
    %c0_10 = arith.constant 0 : index
    %9 = vector.load %arg7[%c0_8, %c0_9, %c0_10] : memref<2x32x1xf32, #tpu.memory_space<vmem>>, vector<1x32x1xf32>
    %10 = vector.shape_cast %9 : vector<1x32x1xf32> to vector<32x1xf32>
    %cst_11 = arith.constant dense<0.000000e+00> : vector<128xf32>
    %11 = vector.multi_reduction <add>, %6, %cst_11 [0] : vector<32x128xf32> to vector<128xf32>
    %12 = vector.shape_cast %11 : vector<128xf32> to vector<1x128xf32>
    %13 = arith.mulf %6, %6 : vector<32x128xf32>
    %cst_12 = arith.constant dense<0.000000e+00> : vector<128xf32>
    %14 = vector.multi_reduction <add>, %13, %cst_12 [0] : vector<32x128xf32> to vector<128xf32>
    %15 = vector.shape_cast %14 : vector<128xf32> to vector<1x128xf32>
    %cst_13 = arith.constant 3.125000e-02 : f32
    %16 = vector.broadcast %cst_13 : f32 to vector<1x128xf32>
    %17 = arith.mulf %12, %16 : vector<1x128xf32>
    %cst_14 = arith.constant 3.125000e-02 : f32
    %18 = vector.broadcast %cst_14 : f32 to vector<1x128xf32>
    %19 = arith.mulf %15, %18 : vector<1x128xf32>
    %20 = arith.mulf %17, %17 : vector<1x128xf32>
    %21 = arith.subf %19, %20 : vector<1x128xf32>
    %22 = vector.broadcast %17 : vector<1x128xf32> to vector<32x128xf32>
    %23 = arith.subf %6, %22 : vector<32x128xf32>
    %cst_15 = arith.constant 9.99999974E-6 : f32
    %24 = vector.broadcast %cst_15 : f32 to vector<1x128xf32>
    %25 = arith.addf %21, %24 : vector<1x128xf32>
    %26 = math.rsqrt %25 : vector<1x128xf32>
    %27 = vector.broadcast %26 : vector<1x128xf32> to vector<32x128xf32>
    %28 = arith.mulf %23, %27 : vector<32x128xf32>
    %29 = vector.broadcast %8 : vector<32x1xf32> to vector<32x128xf32>
    %30 = arith.mulf %28, %29 : vector<32x128xf32>
    %31 = vector.broadcast %10 : vector<32x1xf32> to vector<32x128xf32>
    %32 = arith.addf %30, %31 : vector<32x128xf32>
    %c0_16 = arith.constant 0 : index
    %c0_17 = arith.constant 0 : index
    %c0_18 = arith.constant 0 : index
    %33 = vector.load %arg8[%c0_16, %c0_17, %c0_18] : memref<2x128x32xbf16, #tpu.memory_space<vmem>>, vector<1x128x32xbf16>
    %34 = vector.shape_cast %33 : vector<1x128x32xbf16> to vector<128x32xbf16>
    %35 = arith.truncf %32 : vector<32x128xf32> to vector<32x128xbf16>
    %cst_19 = arith.constant dense<0.000000e+00> : vector<128x128xf32>
    %36 = tpu.matmul %34, %35, %cst_19 {dimension_numbers = #tpu.dot_dimension_numbers<[1], [0], [0], [1], [0, 0, 1, 1], [], []>} : vector<128x32xbf16>, vector<32x128xbf16>, vector<128x128xf32> -> vector<128x128xf32>
    %c0_20 = arith.constant 0 : index
    %c0_21 = arith.constant 0 : index
    %c0_22 = arith.constant 0 : index
    %37 = vector.load %arg9[%c0_20, %c0_21, %c0_22] : memref<2x128x1xf32, #tpu.memory_space<vmem>>, vector<1x128x1xf32>
    %38 = vector.shape_cast %37 : vector<1x128x1xf32> to vector<128x1xf32>
    %39 = vector.broadcast %38 : vector<128x1xf32> to vector<128x128xf32>
    %40 = arith.addf %36, %39 : vector<128x128xf32>
    %cst_23 = arith.constant 0.000000e+00 : f32
    %41 = vector.broadcast %cst_23 : f32 to vector<128x128xf32>
    %42 = arith.maximumf %40, %41 : vector<128x128xf32>
    %c0_24 = arith.constant 0 : index
    %c0_25 = arith.constant 0 : index
    %c0_26 = arith.constant 0 : index
    %43 = vector.load %arg10[%c0_24, %c0_25, %c0_26] : memref<2x32x128xbf16, #tpu.memory_space<vmem>>, vector<1x32x128xbf16>
    %44 = vector.shape_cast %43 : vector<1x32x128xbf16> to vector<32x128xbf16>
    %45 = arith.truncf %42 : vector<128x128xf32> to vector<128x128xbf16>
    %cst_27 = arith.constant dense<0.000000e+00> : vector<32x128xf32>
    %46 = tpu.matmul %44, %45, %cst_27 {dimension_numbers = #tpu.dot_dimension_numbers<[1], [0], [0], [1], [0, 0, 1, 1], [], []>} : vector<32x128xbf16>, vector<128x128xbf16>, vector<32x128xf32> -> vector<32x128xf32>
    %c0_28 = arith.constant 0 : index
    %c0_29 = arith.constant 0 : index
    %c0_30 = arith.constant 0 : index
    %47 = vector.load %arg11[%c0_28, %c0_29, %c0_30] : memref<2x32x1xf32, #tpu.memory_space<vmem>>, vector<1x32x1xf32>
    %48 = vector.shape_cast %47 : vector<1x32x1xf32> to vector<32x1xf32>
    %49 = vector.broadcast %48 : vector<32x1xf32> to vector<32x128xf32>
    %50 = arith.addf %46, %49 : vector<32x128xf32>
    %51 = arith.addf %32, %50 : vector<32x128xf32>
    %c0_31 = arith.constant 0 : index
    %c0_32 = arith.constant 0 : index
    %c0_33 = arith.constant 0 : index
    %52 = vector.load %arg12[%c0_31, %c0_32, %c0_33] : memref<2x32x1xf32, #tpu.memory_space<vmem>>, vector<1x32x1xf32>
    %53 = vector.shape_cast %52 : vector<1x32x1xf32> to vector<32x1xf32>
    %c0_34 = arith.constant 0 : index
    %c0_35 = arith.constant 0 : index
    %c0_36 = arith.constant 0 : index
    %54 = vector.load %arg13[%c0_34, %c0_35, %c0_36] : memref<2x32x1xf32, #tpu.memory_space<vmem>>, vector<1x32x1xf32>
    %55 = vector.shape_cast %54 : vector<1x32x1xf32> to vector<32x1xf32>
    %cst_37 = arith.constant dense<0.000000e+00> : vector<128xf32>
    %56 = vector.multi_reduction <add>, %51, %cst_37 [0] : vector<32x128xf32> to vector<128xf32>
    %57 = vector.shape_cast %56 : vector<128xf32> to vector<1x128xf32>
    %58 = arith.mulf %51, %51 : vector<32x128xf32>
    %cst_38 = arith.constant dense<0.000000e+00> : vector<128xf32>
    %59 = vector.multi_reduction <add>, %58, %cst_38 [0] : vector<32x128xf32> to vector<128xf32>
    %60 = vector.shape_cast %59 : vector<128xf32> to vector<1x128xf32>
    %cst_39 = arith.constant 3.125000e-02 : f32
    %61 = vector.broadcast %cst_39 : f32 to vector<1x128xf32>
    %62 = arith.mulf %57, %61 : vector<1x128xf32>
    %cst_40 = arith.constant 3.125000e-02 : f32
    %63 = vector.broadcast %cst_40 : f32 to vector<1x128xf32>
    %64 = arith.mulf %60, %63 : vector<1x128xf32>
    %65 = arith.mulf %62, %62 : vector<1x128xf32>
    %66 = arith.subf %64, %65 : vector<1x128xf32>
    %67 = vector.broadcast %62 : vector<1x128xf32> to vector<32x128xf32>
    %68 = arith.subf %51, %67 : vector<32x128xf32>
    %cst_41 = arith.constant 9.99999974E-6 : f32
    %69 = vector.broadcast %cst_41 : f32 to vector<1x128xf32>
    %70 = arith.addf %66, %69 : vector<1x128xf32>
    %71 = math.rsqrt %70 : vector<1x128xf32>
    %72 = vector.broadcast %71 : vector<1x128xf32> to vector<32x128xf32>
    %73 = arith.mulf %68, %72 : vector<32x128xf32>
    %74 = vector.broadcast %53 : vector<32x1xf32> to vector<32x128xf32>
    %75 = arith.mulf %73, %74 : vector<32x128xf32>
    %76 = vector.broadcast %55 : vector<32x1xf32> to vector<32x128xf32>
    %77 = arith.addf %75, %76 : vector<32x128xf32>
    %c0_42 = arith.constant 0 : index
    %c0_43 = arith.constant 0 : index
    %c0_44 = arith.constant 0 : index
    %78 = vector.load %arg4[%c0_42, %c0_43, %c0_44] : memref<1x32x32xbf16, #tpu.memory_space<vmem>>, vector<1x32x32xbf16>
    %79 = vector.shape_cast %78 : vector<1x32x32xbf16> to vector<32x32xbf16>
    %80 = arith.truncf %77 : vector<32x128xf32> to vector<32x128xbf16>
    %cst_45 = arith.constant dense<0.000000e+00> : vector<32x128xf32>
    %81 = tpu.matmul %79, %80, %cst_45 {dimension_numbers = #tpu.dot_dimension_numbers<[1], [0], [0], [1], [0, 0, 1, 1], [], []>} : vector<32x32xbf16>, vector<32x128xbf16>, vector<32x128xf32> -> vector<32x128xf32>
    %c0_46 = arith.constant 0 : index
    %c0_47 = arith.constant 0 : index
    %c0_48 = arith.constant 0 : index
    %82 = vector.load %arg5[%c0_46, %c0_47, %c0_48] : memref<1x32x1xf32, #tpu.memory_space<vmem>>, vector<1x32x1xf32>
    %83 = vector.shape_cast %82 : vector<1x32x1xf32> to vector<32x1xf32>
    %84 = vector.broadcast %83 : vector<32x1xf32> to vector<32x128xf32>
    %85 = arith.addf %81, %84 : vector<32x128xf32>
    %c1 = arith.constant 1 : index
    %c0_49 = arith.constant 0 : index
    %c0_50 = arith.constant 0 : index
    %86 = vector.load %arg6[%c1, %c0_49, %c0_50] : memref<2x32x1xf32, #tpu.memory_space<vmem>>, vector<1x32x1xf32>
    %87 = vector.shape_cast %86 : vector<1x32x1xf32> to vector<32x1xf32>
    %c1_51 = arith.constant 1 : index
    %c0_52 = arith.constant 0 : index
    %c0_53 = arith.constant 0 : index
    %88 = vector.load %arg7[%c1_51, %c0_52, %c0_53] : memref<2x32x1xf32, #tpu.memory_space<vmem>>, vector<1x32x1xf32>
    %89 = vector.shape_cast %88 : vector<1x32x1xf32> to vector<32x1xf32>
    %cst_54 = arith.constant dense<0.000000e+00> : vector<128xf32>
    %90 = vector.multi_reduction <add>, %85, %cst_54 [0] : vector<32x128xf32> to vector<128xf32>
    %91 = vector.shape_cast %90 : vector<128xf32> to vector<1x128xf32>
    %92 = arith.mulf %85, %85 : vector<32x128xf32>
    %cst_55 = arith.constant dense<0.000000e+00> : vector<128xf32>
    %93 = vector.multi_reduction <add>, %92, %cst_55 [0] : vector<32x128xf32> to vector<128xf32>
    %94 = vector.shape_cast %93 : vector<128xf32> to vector<1x128xf32>
    %cst_56 = arith.constant 3.125000e-02 : f32
    %95 = vector.broadcast %cst_56 : f32 to vector<1x128xf32>
    %96 = arith.mulf %91, %95 : vector<1x128xf32>
    %cst_57 = arith.constant 3.125000e-02 : f32
    %97 = vector.broadcast %cst_57 : f32 to vector<1x128xf32>
    %98 = arith.mulf %94, %97 : vector<1x128xf32>
    %99 = arith.mulf %96, %96 : vector<1x128xf32>
    %100 = arith.subf %98, %99 : vector<1x128xf32>
    %101 = vector.broadcast %96 : vector<1x128xf32> to vector<32x128xf32>
    %102 = arith.subf %85, %101 : vector<32x128xf32>
    %cst_58 = arith.constant 9.99999974E-6 : f32
    %103 = vector.broadcast %cst_58 : f32 to vector<1x128xf32>
    %104 = arith.addf %100, %103 : vector<1x128xf32>
    %105 = math.rsqrt %104 : vector<1x128xf32>
    %106 = vector.broadcast %105 : vector<1x128xf32> to vector<32x128xf32>
    %107 = arith.mulf %102, %106 : vector<32x128xf32>
    %108 = vector.broadcast %87 : vector<32x1xf32> to vector<32x128xf32>
    %109 = arith.mulf %107, %108 : vector<32x128xf32>
    %110 = vector.broadcast %89 : vector<32x1xf32> to vector<32x128xf32>
    %111 = arith.addf %109, %110 : vector<32x128xf32>
    %c1_59 = arith.constant 1 : index
    %c0_60 = arith.constant 0 : index
    %c0_61 = arith.constant 0 : index
    %112 = vector.load %arg8[%c1_59, %c0_60, %c0_61] : memref<2x128x32xbf16, #tpu.memory_space<vmem>>, vector<1x128x32xbf16>
    %113 = vector.shape_cast %112 : vector<1x128x32xbf16> to vector<128x32xbf16>
    %114 = arith.truncf %111 : vector<32x128xf32> to vector<32x128xbf16>
    %cst_62 = arith.constant dense<0.000000e+00> : vector<128x128xf32>
    %115 = tpu.matmul %113, %114, %cst_62 {dimension_numbers = #tpu.dot_dimension_numbers<[1], [0], [0], [1], [0, 0, 1, 1], [], []>} : vector<128x32xbf16>, vector<32x128xbf16>, vector<128x128xf32> -> vector<128x128xf32>
    %c1_63 = arith.constant 1 : index
    %c0_64 = arith.constant 0 : index
    %c0_65 = arith.constant 0 : index
    %116 = vector.load %arg9[%c1_63, %c0_64, %c0_65] : memref<2x128x1xf32, #tpu.memory_space<vmem>>, vector<1x128x1xf32>
    %117 = vector.shape_cast %116 : vector<1x128x1xf32> to vector<128x1xf32>
    %118 = vector.broadcast %117 : vector<128x1xf32> to vector<128x128xf32>
    %119 = arith.addf %115, %118 : vector<128x128xf32>
    %cst_66 = arith.constant 0.000000e+00 : f32
    %120 = vector.broadcast %cst_66 : f32 to vector<128x128xf32>
    %121 = arith.maximumf %119, %120 : vector<128x128xf32>
    %c1_67 = arith.constant 1 : index
    %c0_68 = arith.constant 0 : index
    %c0_69 = arith.constant 0 : index
    %122 = vector.load %arg10[%c1_67, %c0_68, %c0_69] : memref<2x32x128xbf16, #tpu.memory_space<vmem>>, vector<1x32x128xbf16>
    %123 = vector.shape_cast %122 : vector<1x32x128xbf16> to vector<32x128xbf16>
    %124 = arith.truncf %121 : vector<128x128xf32> to vector<128x128xbf16>
    %cst_70 = arith.constant dense<0.000000e+00> : vector<32x128xf32>
    %125 = tpu.matmul %123, %124, %cst_70 {dimension_numbers = #tpu.dot_dimension_numbers<[1], [0], [0], [1], [0, 0, 1, 1], [], []>} : vector<32x128xbf16>, vector<128x128xbf16>, vector<32x128xf32> -> vector<32x128xf32>
    %c1_71 = arith.constant 1 : index
    %c0_72 = arith.constant 0 : index
    %c0_73 = arith.constant 0 : index
    %126 = vector.load %arg11[%c1_71, %c0_72, %c0_73] : memref<2x32x1xf32, #tpu.memory_space<vmem>>, vector<1x32x1xf32>
    %127 = vector.shape_cast %126 : vector<1x32x1xf32> to vector<32x1xf32>
    %128 = vector.broadcast %127 : vector<32x1xf32> to vector<32x128xf32>
    %129 = arith.addf %125, %128 : vector<32x128xf32>
    %130 = arith.addf %111, %129 : vector<32x128xf32>
    %c1_74 = arith.constant 1 : index
    %c0_75 = arith.constant 0 : index
    %c0_76 = arith.constant 0 : index
    %131 = vector.load %arg12[%c1_74, %c0_75, %c0_76] : memref<2x32x1xf32, #tpu.memory_space<vmem>>, vector<1x32x1xf32>
    %132 = vector.shape_cast %131 : vector<1x32x1xf32> to vector<32x1xf32>
    %c1_77 = arith.constant 1 : index
    %c0_78 = arith.constant 0 : index
    %c0_79 = arith.constant 0 : index
    %133 = vector.load %arg13[%c1_77, %c0_78, %c0_79] : memref<2x32x1xf32, #tpu.memory_space<vmem>>, vector<1x32x1xf32>
    %134 = vector.shape_cast %133 : vector<1x32x1xf32> to vector<32x1xf32>
    %cst_80 = arith.constant dense<0.000000e+00> : vector<128xf32>
    %135 = vector.multi_reduction <add>, %130, %cst_80 [0] : vector<32x128xf32> to vector<128xf32>
    %136 = vector.shape_cast %135 : vector<128xf32> to vector<1x128xf32>
    %137 = arith.mulf %130, %130 : vector<32x128xf32>
    %cst_81 = arith.constant dense<0.000000e+00> : vector<128xf32>
    %138 = vector.multi_reduction <add>, %137, %cst_81 [0] : vector<32x128xf32> to vector<128xf32>
    %139 = vector.shape_cast %138 : vector<128xf32> to vector<1x128xf32>
    %cst_82 = arith.constant 3.125000e-02 : f32
    %140 = vector.broadcast %cst_82 : f32 to vector<1x128xf32>
    %141 = arith.mulf %136, %140 : vector<1x128xf32>
    %cst_83 = arith.constant 3.125000e-02 : f32
    %142 = vector.broadcast %cst_83 : f32 to vector<1x128xf32>
    %143 = arith.mulf %139, %142 : vector<1x128xf32>
    %144 = arith.mulf %141, %141 : vector<1x128xf32>
    %145 = arith.subf %143, %144 : vector<1x128xf32>
    %146 = vector.broadcast %141 : vector<1x128xf32> to vector<32x128xf32>
    %147 = arith.subf %130, %146 : vector<32x128xf32>
    %cst_84 = arith.constant 9.99999974E-6 : f32
    %148 = vector.broadcast %cst_84 : f32 to vector<1x128xf32>
    %149 = arith.addf %145, %148 : vector<1x128xf32>
    %150 = math.rsqrt %149 : vector<1x128xf32>
    %151 = vector.broadcast %150 : vector<1x128xf32> to vector<32x128xf32>
    %152 = arith.mulf %147, %151 : vector<32x128xf32>
    %153 = vector.broadcast %132 : vector<32x1xf32> to vector<32x128xf32>
    %154 = arith.mulf %152, %153 : vector<32x128xf32>
    %155 = vector.broadcast %134 : vector<32x1xf32> to vector<32x128xf32>
    %156 = arith.addf %154, %155 : vector<32x128xf32>
    %c0_85 = arith.constant 0 : index
    %c0_86 = arith.constant 0 : index
    %157 = vector.load %arg14[%c0_85, %c0_86] : memref<8x32xbf16, #tpu.memory_space<vmem>>, vector<8x32xbf16>
    %158 = arith.truncf %156 : vector<32x128xf32> to vector<32x128xbf16>
    %cst_87 = arith.constant dense<0.000000e+00> : vector<8x128xf32>
    %159 = tpu.matmul %157, %158, %cst_87 {dimension_numbers = #tpu.dot_dimension_numbers<[1], [0], [0], [1], [0, 0, 1, 1], [], []>} : vector<8x32xbf16>, vector<32x128xbf16>, vector<8x128xf32> -> vector<8x128xf32>
    %160 = vector.extract_strided_slice %159 {offsets = [0, 0], sizes = [1, 128], strides = [1, 1]} : vector<8x128xf32> to vector<1x128xf32>
    %c0_88 = arith.constant 0 : index
    %c0_89 = arith.constant 0 : index
    %161 = memref.load %arg15[%c0_88, %c0_89] : memref<1x1xf32, #tpu.memory_space<smem>>
    %162 = vector.broadcast %161 : f32 to vector<1x128xf32>
    %163 = arith.addf %160, %162 : vector<1x128xf32>
    %c0_90 = arith.constant 0 : index
    %c0_91 = arith.constant 0 : index
    %164 = vector.load %arg16[%c0_90, %c0_91] : memref<1x128xf32, #tpu.memory_space<vmem>>, vector<1x128xf32>
    tpu.vector_store %arg16[%c0_90, %c0_91], %163 {strides = array<i32>} : memref<1x128xf32, #tpu.memory_space<vmem>>, vector<1x128xf32>,
    return
  }
  func.func @transform_0(%arg0: i32) -> (i32, i32) {
    %c0_i32 = arith.constant 0 : i32
    %c0_i32_0 = arith.constant 0 : i32
    return %c0_i32, %arg0 : i32, i32
  }
  func.func @transform_1(%arg0: i32) -> (i32, i32) {
    %c0_i32 = arith.constant 0 : i32
    %c0_i32_0 = arith.constant 0 : i32
    %c0_i32_1 = arith.constant 0 : i32
    return %c0_i32, %c0_i32_0 : i32, i32
  }
  func.func @transform_2(%arg0: i32) -> (i32, i32) {
    %c0_i32 = arith.constant 0 : i32
    %c0_i32_0 = arith.constant 0 : i32
    %c0_i32_1 = arith.constant 0 : i32
    return %c0_i32, %c0_i32_0 : i32, i32
  }
  func.func @transform_3(%arg0: i32) -> (i32, i32, i32) {
    %c0_i32 = arith.constant 0 : i32
    %c0_i32_0 = arith.constant 0 : i32
    %c0_i32_1 = arith.constant 0 : i32
    %c0_i32_2 = arith.constant 0 : i32
    return %c0_i32, %c0_i32_0, %c0_i32_1 : i32, i32, i32
  }
  func.func @transform_4(%arg0: i32) -> (i32, i32, i32) {
    %c0_i32 = arith.constant 0 : i32
    %c0_i32_0 = arith.constant 0 : i32
    %c0_i32_1 = arith.constant 0 : i32
    %c0_i32_2 = arith.constant 0 : i32
    return %c0_i32, %c0_i32_0, %c0_i32_1 : i32, i32, i32
  }
  func.func @transform_5(%arg0: i32) -> (i32, i32, i32) {
    %c0_i32 = arith.constant 0 : i32
    %c0_i32_0 = arith.constant 0 : i32
    %c0_i32_1 = arith.constant 0 : i32
    %c0_i32_2 = arith.constant 0 : i32
    return %c0_i32, %c0_i32_0, %c0_i32_1 : i32, i32, i32
  }
  func.func @transform_6(%arg0: i32) -> (i32, i32, i32) {
    %c0_i32 = arith.constant 0 : i32
    %c0_i32_0 = arith.constant 0 : i32
    %c0_i32_1 = arith.constant 0 : i32
    %c0_i32_2 = arith.constant 0 : i32
    return %c0_i32, %c0_i32_0, %c0_i32_1 : i32, i32, i32
  }
  func.func @transform_7(%arg0: i32) -> (i32, i32, i32) {
    %c0_i32 = arith.constant 0 : i32
    %c0_i32_0 = arith.constant 0 : i32
    %c0_i32_1 = arith.constant 0 : i32
    %c0_i32_2 = arith.constant 0 : i32
    return %c0_i32, %c0_i32_0, %c0_i32_1 : i32, i32, i32
  }
  func.func @transform_8(%arg0: i32) -> (i32, i32, i32) {
    %c0_i32 = arith.constant 0 : i32
    %c0_i32_0 = arith.constant 0 : i32
    %c0_i32_1 = arith.constant 0 : i32
    %c0_i32_2 = arith.constant 0 : i32
    return %c0_i32, %c0_i32_0, %c0_i32_1 : i32, i32, i32
  }
  func.func @transform_9(%arg0: i32) -> (i32, i32, i32) {
    %c0_i32 = arith.constant 0 : i32
    %c0_i32_0 = arith.constant 0 : i32
    %c0_i32_1 = arith.constant 0 : i32
    %c0_i32_2 = arith.constant 0 : i32
    return %c0_i32, %c0_i32_0, %c0_i32_1 : i32, i32, i32
  }
  func.func @transform_10(%arg0: i32) -> (i32, i32, i32) {
    %c0_i32 = arith.constant 0 : i32
    %c0_i32_0 = arith.constant 0 : i32
    %c0_i32_1 = arith.constant 0 : i32
    %c0_i32_2 = arith.constant 0 : i32
    return %c0_i32, %c0_i32_0, %c0_i32_1 : i32, i32, i32
  }
  func.func @transform_11(%arg0: i32) -> (i32, i32, i32) {
    %c0_i32 = arith.constant 0 : i32
    %c0_i32_0 = arith.constant 0 : i32
    %c0_i32_1 = arith.constant 0 : i32
    %c0_i32_2 = arith.constant 0 : i32
    return %c0_i32, %c0_i32_0, %c0_i32_1 : i32, i32, i32
  }
  func.func @transform_12(%arg0: i32) -> (i32, i32, i32) {
    %c0_i32 = arith.constant 0 : i32
    %c0_i32_0 = arith.constant 0 : i32
    %c0_i32_1 = arith.constant 0 : i32
    %c0_i32_2 = arith.constant 0 : i32
    return %c0_i32, %c0_i32_0, %c0_i32_1 : i32, i32, i32
  }
  func.func @transform_13(%arg0: i32) -> (i32, i32) {
    %c0_i32 = arith.constant 0 : i32
    %c0_i32_0 = arith.constant 0 : i32
    %c0_i32_1 = arith.constant 0 : i32
    return %c0_i32, %c0_i32_0 : i32, i32
  }
  func.func @transform_14(%arg0: i32) -> (i32, i32) {
    %c0_i32 = arith.constant 0 : i32
    %c0_i32_0 = arith.constant 0 : i32
    %c0_i32_1 = arith.constant 0 : i32
    return %c0_i32, %c0_i32_0 : i32, i32
  }
  func.func @transform_15(%arg0: i32) -> (i32, i32) {
    %c0_i32 = arith.constant 0 : i32
    %c0_i32_0 = arith.constant 0 : i32
    return %c0_i32, %arg0 : i32, i32
  }
}

</mosaic_0001>

<llo_original>
// kernel: tpu_custom_call.1
$region0: #{tpu_custom_call.1}
  #allocation0 [shape = 'u32[]', space=smem, size = 0x4, offset = 0x4, fixed_abs, tag = 'smem constant byte address 0x4 - core index']
  #allocation1 [shape = 'u32[144,128]{1,0:T(1,128)}', space=vmem, size = 0x12000, scoped, tag = 'internal scratch']
  #allocation2 [shape = 'f32[1,1]{1,0:T(1,128)S(6)}', space=smem, size = 0x200, scoped, tag = 'scoped memory for tpu_custom_call.1']
  %s0 = inlined_call_operand.vmem [shape: f32[8,128], index: 0, kind: input, shape index: {}]
  %s1 = inlined_call_operand.vmem [shape: bf16[32,8], index: 1, kind: input, shape index: {}]
  %s2 = inlined_call_operand.vmem [shape: f32[32,1], index: 2, kind: input, shape index: {}]
  %s3 = inlined_call_operand.vmem [shape: bf16[1,32,32], index: 3, kind: input, shape index: {}]
  %s4 = inlined_call_operand.vmem [shape: f32[1,32,1], index: 4, kind: input, shape index: {}]
  %s5 = inlined_call_operand.vmem [shape: f32[2,32,1], index: 5, kind: input, shape index: {}]
  %s6 = inlined_call_operand.vmem [shape: f32[2,32,1], index: 6, kind: input, shape index: {}]
  %s7 = inlined_call_operand.vmem [shape: bf16[2,128,32], index: 7, kind: input, shape index: {}]
  %s8 = inlined_call_operand.vmem [shape: f32[2,128,1], index: 8, kind: input, shape index: {}]
  %s9 = inlined_call_operand.vmem [shape: bf16[2,32,128], index: 9, kind: input, shape index: {}]
  %s10 = inlined_call_operand.vmem [shape: f32[2,32,1], index: 10, kind: input, shape index: {}]
  %s11 = inlined_call_operand.vmem [shape: f32[2,32,1], index: 11, kind: input, shape index: {}]
  %s12 = inlined_call_operand.vmem [shape: f32[2,32,1], index: 12, kind: input, shape index: {}]
  %s13 = inlined_call_operand.vmem [shape: bf16[8,32], index: 13, kind: input, shape index: {}]
  %s14 = inlined_call_operand.<no memory space> [shape: f32[1,1], index: 14, kind: input, shape index: {}]
  %s15 = inlined_call_operand.hbm [shape: f32[1,128], index: 15, kind: output, shape index: {}]
  %s16 = sld [smem:[#allocation0]]
  $region70: #{tpu_custom_call.1} parent=0
    _
  %s18 = ssub.s32 1, %s16
  %s19 = scalar_select 0, %s18, %s16
  %20 = sst [smem:[#allocation2]] %s14
  $region1: #{tpu_custom_call.1} parent=0
    #allocation3 [shape = 'u8[512]{0}', space=vmem, size = 0x400, scoped, tag = 'output window, operand 0, single buffered']
    #allocation4 [shape = 's32[1]{0}', space=sflag, size = 0x4, scoped, tag = 'scoped memory for tpu_custom_call.1']
    %21 = vsyncpa [#allocation4], 0
    // Predicated region
    $region2: #{tpu_custom_call.1} parent=1 // pred_check
      _
    $region3: #{tpu_custom_call.1} parent=1 // pred_check_branch
      %23 = sbr.rel (0) target = $region5
    $region4: #{tpu_custom_call.1} parent=1 // pred_region
      _
    $region5: #{tpu_custom_call.1} parent=1 // pred_fallthru
      _
    // Predicated region
    $region6: #{tpu_custom_call.1} parent=1 // pred_check
      _
    $region7: #{tpu_custom_call.1} parent=1 // pred_check_branch
      %25 = sbr.rel (0) target = $region9
    $region8: #{tpu_custom_call.1} parent=1 // pred_region
      _
    $region9: #{tpu_custom_call.1} parent=1 // pred_fallthru
      _
    // Predicated region
    $region10: #{tpu_custom_call.1} parent=1 // pred_check
      _
    $region11: #{tpu_custom_call.1} parent=1 // pred_check_branch
      %27 = sbr.rel (0) target = $region13
    $region12: #{tpu_custom_call.1} parent=1 // pred_region
      _
    $region13: #{tpu_custom_call.1} parent=1 // pred_fallthru
      _
    // Predicated region
    $region14: #{tpu_custom_call.1} parent=1 // pred_check
      _
    $region15: #{tpu_custom_call.1} parent=1 // pred_check_branch
      %29 = sbr.rel (0) target = $region17
    $region16: #{tpu_custom_call.1} parent=1 // pred_region
      _
    $region17: #{tpu_custom_call.1} parent=1 // pred_fallthru
      _
    // Predicated region
    $region18: #{tpu_custom_call.1} parent=1 // pred_check
      _
    $region19: #{tpu_custom_call.1} parent=1 // pred_check_branch
      %31 = sbr.rel (0) target = $region21
    $region20: #{tpu_custom_call.1} parent=1 // pred_region
      _
    $region21: #{tpu_custom_call.1} parent=1 // pred_fallthru
      _
    // Predicated region
    $region22: #{tpu_custom_call.1} parent=1 // pred_check
      _
    $region23: #{tpu_custom_call.1} parent=1 // pred_check_branch
      %33 = sbr.rel (0) target = $region25
    $region24: #{tpu_custom_call.1} parent=1 // pred_region
      _
    $region25: #{tpu_custom_call.1} parent=1 // pred_fallthru
      _
    // Predicated region
    $region26: #{tpu_custom_call.1} parent=1 // pred_check
      _
    $region27: #{tpu_custom_call.1} parent=1 // pred_check_branch
      %35 = sbr.rel (0) target = $region29
    $region28: #{tpu_custom_call.1} parent=1 // pred_region
      _
    $region29: #{tpu_custom_call.1} parent=1 // pred_fallthru
      _
    // Predicated region
    $region30: #{tpu_custom_call.1} parent=1 // pred_check
      _
    $region31: #{tpu_custom_call.1} parent=1 // pred_check_branch
      %37 = sbr.rel (0) target = $region33
    $region32: #{tpu_custom_call.1} parent=1 // pred_region
      _
    $region33: #{tpu_custom_call.1} parent=1 // pred_fallthru
      _
    // Predicated region
    $region34: #{tpu_custom_call.1} parent=1 // pred_check
      _
    $region35: #{tpu_custom_call.1} parent=1 // pred_check_branch
      %39 = sbr.rel (0) target = $region37
    $region36: #{tpu_custom_call.1} parent=1 // pred_region
      _
    $region37: #{tpu_custom_call.1} parent=1 // pred_fallthru
      _
    // Predicated region
    $region38: #{tpu_custom_call.1} parent=1 // pred_check
      _
    $region39: #{tpu_custom_call.1} parent=1 // pred_check_branch
      %41 = sbr.rel (0) target = $region41
    $region40: #{tpu_custom_call.1} parent=1 // pred_region
      _
    $region41: #{tpu_custom_call.1} parent=1 // pred_fallthru
      _
    // Predicated region
    $region42: #{tpu_custom_call.1} parent=1 // pred_check
      _
    $region43: #{tpu_custom_call.1} parent=1 // pred_check_branch
      %43 = sbr.rel (0) target = $region45
    $region44: #{tpu_custom_call.1} parent=1 // pred_region
      _
    $region45: #{tpu_custom_call.1} parent=1 // pred_fallthru
      _
    // Predicated region
    $region46: #{tpu_custom_call.1} parent=1 // pred_check
      _
    $region47: #{tpu_custom_call.1} parent=1 // pred_check_branch
      %45 = sbr.rel (0) target = $region49
    $region48: #{tpu_custom_call.1} parent=1 // pred_region
      _
    $region49: #{tpu_custom_call.1} parent=1 // pred_fallthru
      _
    // Predicated region
    $region50: #{tpu_custom_call.1} parent=1 // pred_check
      _
    $region51: #{tpu_custom_call.1} parent=1 // pred_check_branch
      %47 = sbr.rel (0) target = $region53
    $region52: #{tpu_custom_call.1} parent=1 // pred_region
      _
    $region53: #{tpu_custom_call.1} parent=1 // pred_fallthru
      _
    // Predicated region
    $region54: #{tpu_custom_call.1} parent=1 // pred_check
      _
    $region55: #{tpu_custom_call.1} parent=1 // pred_check_branch
      %49 = sbr.rel (0) target = $region57
    $region56: #{tpu_custom_call.1} parent=1 // pred_region
      _
    $region57: #{tpu_custom_call.1} parent=1 // pred_fallthru
      _
    // Predicated region
    $region58: #{tpu_custom_call.1} parent=1 // pred_check
      _
    $region59: #{tpu_custom_call.1} parent=1 // pred_check_branch
      %51 = sbr.rel (0) target = $region61
    $region60: #{tpu_custom_call.1} parent=1 // pred_region
      _
    $region61: #{tpu_custom_call.1} parent=1 // pred_fallthru
      _
    %v53 = vld [vmem:[%s0] sm:$0xff]
    %v54 = vpack.c.bf16 %v53, %v53
    %v55 = vld [vmem:[%s1] sm:$0xf]
    %v56 = vld [vmem:[%s1 + $0x4] sm:$0xf]
    %v57 = vld [vmem:[%s1 + $0x8] sm:$0xf]
    %v58 = vld [vmem:[%s1 + $0xc] sm:$0xf]
    %v59 = vld [vmem:[%s2] sm:$0xff]
    %v60 = vld [vmem:[%s2 + $0x8] sm:$0xff]
    %v61 = vld [vmem:[%s2 + $0x10] sm:$0xff]
    %v62 = vld [vmem:[%s2 + $0x18] sm:$0xff]
    %64 = vset.pattern.permute.xlu0 0
    %65 = vperm.xlu0 %64, %v59
    %v66 = vpop.permute.xlu0 %65
    %69 = vset.pattern.permute.xlu0 0
    %70 = vperm.xlu0 %69, %v60
    %v71 = vpop.permute.xlu0 %70
    %74 = vset.pattern.permute.xlu0 0
    %75 = vperm.xlu0 %74, %v61
    %v76 = vpop.permute.xlu0 %75
    %79 = vset.pattern.permute.xlu0 0
    %80 = vperm.xlu0 %79, %v62
    %v81 = vpop.permute.xlu0 %80
    %v87 = vunpack.c.l.b16 %v55
    %v88 = vunpack.c.l.b16 %v56
    %v89 = vunpack.c.l.b16 %v57
    %v90 = vunpack.c.l.b16 %v58
    %v91 = vpack.c.b16 %v88, %v87
    %v92 = vpack.c.b16 %v90, %v89
    %vm93 = vcmask 64512
    %v95 = vsel %vm93, %v91, 0
    %v98 = vsel %vm93, %v92, 0
    %vm100 = vcmask 1043456
    %v102 = vsel %vm100, %v54, 0
    %104 = vmatprep.subr.bf16.mxu0 0
    %105 = vmatpush1.bf16.msra.mxu0 0
    %106 = vmatprep.subr.bf16.mxu0 0
    %107 = vmatpush1.bf16.msra.mxu0 0
    %108 = vmatprep.subr.bf16.mxu0 0
    %109 = vmatpush1.bf16.msra.mxu0 0
    %110 = vmatprep.subr.bf16.mxu0 0
    %111 = vmatpush1.bf16.msra.mxu0 0
    %112 = vmatprep.subr.bf16.mxu0 0
    %113 = vmatpush1.bf16.msra.mxu0 0
    %114 = vmatprep.subr.bf16.mxu0 0
    %115 = vmatpush1.bf16.msra.mxu0 0
    %116 = vmatprep.subr.bf16.mxu0 0
    %117 = vmatpush1.bf16.msra.mxu0 0
    %118 = vmatprep.subr.bf16.mxu0 0
    %119 = vmatpush1.bf16.msra.mxu0 %v102
    %120 = vmatprep.subr.bf16.mxu0 0
    %121 = vmatpush2.bf16.msra.mxu0 0
    %122 = vmatprep.subr.bf16.mxu0 0
    %123 = vmatpush2.bf16.msra.mxu0 0
    %124 = vmatprep.subr.bf16.mxu0 0
    %125 = vmatpush2.bf16.msra.mxu0 0
    %126 = vmatprep.subr.bf16.mxu0 0
    %127 = vmatpush2.bf16.msra.mxu0 0
    %128 = vmatprep.subr.bf16.mxu0 0
    %129 = vmatpush2.bf16.msra.mxu0 0
    %130 = vmatprep.subr.bf16.mxu0 0
    %131 = vmatpush2.bf16.msra.mxu0 0
    %132 = vmatprep.subr.bf16.mxu0 0
    %133 = vmatpush2.bf16.msra.mxu0 0
    %134 = vmatprep.subr.bf16.mxu0 0
    %135 = vmatpush2.bf16.msra.mxu0 0
    %136 = vmatprep.mubr.bf16.mxu0 0
    %137 = vmatmul.mubr.bf16.gmra.mxu0 %v95
    %v138 = vpop.f32.mrf.mxu0
    %v139 = vadd.f32 %v66, %v138
    %v140 = vpop.f32.mrf.mxu0
    %v141 = vpop.f32.mrf.mxu0
    %v142 = vadd.f32 %v71, %v141
    %v143 = vpop.f32.mrf.mxu0
    %144 = vmatprep.mubr.bf16.mxu0 0
    %145 = vmatmul.mubr.bf16.gmra.mxu0 %v98
    %v146 = vpop.f32.mrf.mxu0
    %v147 = vadd.f32 %v76, %v146
    %v148 = vpop.f32.mrf.mxu0
    %v149 = vpop.f32.mrf.mxu0
    %v150 = vadd.f32 %v81, %v149
    %v151 = vpop.f32.mrf.mxu0
    %152 = vdwg.mxu0
    %v153 = vld [vmem:[%s5] sm:$0xff]
    %v154 = vld [vmem:[%s5 + $0x8] sm:$0xff]
    %v155 = vld [vmem:[%s5 + $0x10] sm:$0xff]
    %v156 = vld [vmem:[%s5 + $0x18] sm:$0xff]
    %v157 = vld [vmem:[%s6] sm:$0xff]
    %v158 = vld [vmem:[%s6 + $0x8] sm:$0xff]
    %v159 = vld [vmem:[%s6 + $0x10] sm:$0xff]
    %v160 = vld [vmem:[%s6 + $0x18] sm:$0xff]
    %v161 = vadd.f32 %v139, %v142
    %v162 = vadd.f32 %v161, %v147
    %v163 = vadd.f32 %v162, %v150
    %v164 = vrot.slane %v163, 4
    %v165 = vadd.f32 %v163, %v164
    %v166 = vrot.slane %v165, 2
    %v167 = vadd.f32 %v165, %v166
    %v168 = vrot.slane %v167, 1
    %v169 = vadd.f32 %v167, %v168
    %v170 = vmul.f32 %v139, %v139
    %v171 = vmul.f32 %v142, %v142
    %v172 = vmul.f32 %v147, %v147
    %v173 = vmul.f32 %v150, %v150
    %v174 = vadd.f32 %v170, %v171
    %v175 = vadd.f32 %v174, %v172
    %v176 = vadd.f32 %v175, %v173
    %v177 = vrot.slane %v176, 4
    %v178 = vadd.f32 %v176, %v177
    %v179 = vrot.slane %v178, 2
    %v180 = vadd.f32 %v178, %v179
    %v181 = vrot.slane %v180, 1
    %v182 = vadd.f32 %v180, %v181
    %v183 = vmul.f32 %v169, 0.03125
    %v184 = vmul.f32 %v182, 0.03125
    %v185 = vmul.f32 %v183, %v183
    %v186 = vsub.f32 %v184, %v185
    %v187 = vsub.f32 %v139, %v183
    %v188 = vsub.f32 %v142, %v183
    %v189 = vsub.f32 %v147, %v183
    %v190 = vsub.f32 %v150, %v183
    %v191 = vadd.f32 %v186, 1e-05
    %v192 = vrsqrt.pop %v191
    %v193 = vmul.f32 %v187, %v192
    %v194 = vmul.f32 %v188, %v192
    %v195 = vmul.f32 %v189, %v192
    %v196 = vmul.f32 %v190, %v192
    %198 = vset.pattern.permute.xlu0 0
    %199 = vperm.xlu0 %198, %v153
    %v200 = vpop.permute.xlu0 %199
    %203 = vset.pattern.permute.xlu0 0
    %204 = vperm.xlu0 %203, %v154
    %v205 = vpop.permute.xlu0 %204
    %208 = vset.pattern.permute.xlu0 0
    %209 = vperm.xlu0 %208, %v155
    %v210 = vpop.permute.xlu0 %209
    %213 = vset.pattern.permute.xlu0 0
    %214 = vperm.xlu0 %213, %v156
    %v215 = vpop.permute.xlu0 %214
    %v217 = vmul.f32 %v193, %v200
    %v218 = vmul.f32 %v194, %v205
    %v219 = vmul.f32 %v195, %v210
    %v220 = vmul.f32 %v196, %v215
    %222 = vset.pattern.permute.xlu0 0
    %223 = vperm.xlu0 %222, %v157
    %v224 = vpop.permute.xlu0 %223
    %227 = vset.pattern.permute.xlu0 0
    %228 = vperm.xlu0 %227, %v158
    %v229 = vpop.permute.xlu0 %228
    %232 = vset.pattern.permute.xlu0 0
    %233 = vperm.xlu0 %232, %v159
    %v234 = vpop.permute.xlu0 %233
    %237 = vset.pattern.permute.xlu0 0
    %238 = vperm.xlu0 %237, %v160
    %v239 = vpop.permute.xlu0 %238
    %v241 = vadd.f32 %v217, %v224
    %v242 = vadd.f32 %v218, %v229
    %v243 = vadd.f32 %v219, %v234
    %v244 = vadd.f32 %v220, %v239
    %v245 = vld [vmem:[%s7] sm:$0xf]
    %v246 = vld [vmem:[%s7 + $0x4] sm:$0xf]
    %v247 = vld [vmem:[%s7 + $0x8] sm:$0xf]
    %v248 = vld [vmem:[%s7 + $0xc] sm:$0xf]
    %v249 = vld [vmem:[%s7 + $0x10] sm:$0xf]
    %v250 = vld [vmem:[%s7 + $0x14] sm:$0xf]
    %v251 = vld [vmem:[%s7 + $0x18] sm:$0xf]
    %v252 = vld [vmem:[%s7 + $0x1c] sm:$0xf]
    %v253 = vld [vmem:[%s7 + $0x20] sm:$0xf]
    %v254 = vld [vmem:[%s7 + $0x24] sm:$0xf]
    %v255 = vld [vmem:[%s7 + $0x28] sm:$0xf]
    %v256 = vld [vmem:[%s7 + $0x2c] sm:$0xf]
    %v257 = vld [vmem:[%s7 + $0x30] sm:$0xf]
    %v258 = vld [vmem:[%s7 + $0x34] sm:$0xf]
    %v259 = vld [vmem:[%s7 + $0x38] sm:$0xf]
    %v260 = vld [vmem:[%s7 + $0x3c] sm:$0xf]
    %v261 = vpack.c.bf16 %v242, %v241
    %v262 = vpack.c.bf16 %v244, %v243
    %v263 = vld [vmem:[%s8] sm:$0xff]
    %v264 = vld [vmem:[%s8 + $0x8] sm:$0xff]
    %v265 = vld [vmem:[%s8 + $0x10] sm:$0xff]
    %v266 = vld [vmem:[%s8 + $0x18] sm:$0xff]
    %v267 = vld [vmem:[%s8 + $0x20] sm:$0xff]
    %v268 = vld [vmem:[%s8 + $0x28] sm:$0xff]
    %v269 = vld [vmem:[%s8 + $0x30] sm:$0xff]
    %v270 = vld [vmem:[%s8 + $0x38] sm:$0xff]
    %v271 = vld [vmem:[%s8 + $0x40] sm:$0xff]
    %v272 = vld [vmem:[%s8 + $0x48] sm:$0xff]
    %v273 = vld [vmem:[%s8 + $0x50] sm:$0xff]
    %v274 = vld [vmem:[%s8 + $0x58] sm:$0xff]
    %v275 = vld [vmem:[%s8 + $0x60] sm:$0xff]
    %v276 = vld [vmem:[%s8 + $0x68] sm:$0xff]
    %v277 = vld [vmem:[%s8 + $0x70] sm:$0xff]
    %v278 = vld [vmem:[%s8 + $0x78] sm:$0xff]
    %280 = vset.pattern.permute.xlu0 0
    %281 = vperm.xlu0 %280, %v263
    %v282 = vpop.permute.xlu0 %281
    %285 = vset.pattern.permute.xlu0 0
    %286 = vperm.xlu0 %285, %v264
    %v287 = vpop.permute.xlu0 %286
    %290 = vset.pattern.permute.xlu0 0
    %291 = vperm.xlu0 %290, %v265
    %v292 = vpop.permute.xlu0 %291
    %295 = vset.pattern.permute.xlu0 0
    %296 = vperm.xlu0 %295, %v266
    %v297 = vpop.permute.xlu0 %296
    %300 = vset.pattern.permute.xlu0 0
    %301 = vperm.xlu0 %300, %v267
    %v302 = vpop.permute.xlu0 %301
    %305 = vset.pattern.permute.xlu0 0
    %306 = vperm.xlu0 %305, %v268
    %v307 = vpop.permute.xlu0 %306
    %310 = vset.pattern.permute.xlu0 0
    %311 = vperm.xlu0 %310, %v269
    %v312 = vpop.permute.xlu0 %311
    %315 = vset.pattern.permute.xlu0 0
    %316 = vperm.xlu0 %315, %v270
    %v317 = vpop.permute.xlu0 %316
    %320 = vset.pattern.permute.xlu0 0
    %321 = vperm.xlu0 %320, %v271
    %v322 = vpop.permute.xlu0 %321
    %325 = vset.pattern.permute.xlu0 0
    %326 = vperm.xlu0 %325, %v272
    %v327 = vpop.permute.xlu0 %326
    %330 = vset.pattern.permute.xlu0 0
    %331 = vperm.xlu0 %330, %v273
    %v332 = vpop.permute.xlu0 %331
    %335 = vset.pattern.permute.xlu0 0
    %336 = vperm.xlu0 %335, %v274
    %v337 = vpop.permute.xlu0 %336
    %340 = vset.pattern.permute.xlu0 0
    %341 = vperm.xlu0 %340, %v275
    %v342 = vpop.permute.xlu0 %341
    %345 = vset.pattern.permute.xlu0 0
    %346 = vperm.xlu0 %345, %v276
    %v347 = vpop.permute.xlu0 %346
    %350 = vset.pattern.permute.xlu0 0
    %351 = vperm.xlu0 %350, %v277
    %v352 = vpop.permute.xlu0 %351
    %355 = vset.pattern.permute.xlu0 0
    %356 = vperm.xlu0 %355, %v278
    %v357 = vpop.permute.xlu0 %356
    %v375 = vunpack.c.l.b16 %v245
    %v376 = vunpack.c.l.b16 %v246
    %v377 = vunpack.c.l.b16 %v247
    %v378 = vunpack.c.l.b16 %v248
    %v379 = vunpack.c.l.b16 %v249
    %v380 = vunpack.c.l.b16 %v250
    %v381 = vunpack.c.l.b16 %v251
    %v382 = vunpack.c.l.b16 %v252
    %v383 = vunpack.c.l.b16 %v253
    %v384 = vunpack.c.l.b16 %v254
    %v385 = vunpack.c.l.b16 %v255
    %v386 = vunpack.c.l.b16 %v256
    %v387 = vunpack.c.l.b16 %v257
    %v388 = vunpack.c.l.b16 %v258
    %v389 = vunpack.c.l.b16 %v259
    %v390 = vunpack.c.l.b16 %v260
    %v391 = vpack.c.b16 %v376, %v375
    %v392 = vpack.c.b16 %v378, %v377
    %v393 = vpack.c.b16 %v380, %v379
    %v394 = vpack.c.b16 %v382, %v381
    %v395 = vpack.c.b16 %v384, %v383
    %v396 = vpack.c.b16 %v386, %v385
    %v397 = vpack.c.b16 %v388, %v387
    %v398 = vpack.c.b16 %v390, %v389
    %vm399 = vcmask 261120
    %v401 = vsel %vm399, %v391, 0
    %v404 = vsel %vm399, %v392, 0
    %v407 = vsel %vm399, %v393, 0
    %v410 = vsel %vm399, %v394, 0
    %v413 = vsel %vm399, %v395, 0
    %v416 = vsel %vm399, %v396, 0
    %v419 = vsel %vm399, %v397, 0
    %v422 = vsel %vm399, %v398, 0
    %424 = vmatprep.subr.bf16.mxu0 0
    %425 = vmatpush1.bf16.msra.mxu0 0
    %426 = vmatprep.subr.bf16.mxu0 0
    %427 = vmatpush1.bf16.msra.mxu0 0
    %428 = vmatprep.subr.bf16.mxu0 0
    %429 = vmatpush1.bf16.msra.mxu0 0
    %430 = vmatprep.subr.bf16.mxu0 0
    %431 = vmatpush1.bf16.msra.mxu0 0
    %432 = vmatprep.subr.bf16.mxu0 0
    %433 = vmatpush1.bf16.msra.mxu0 0
    %434 = vmatprep.subr.bf16.mxu0 0
    %435 = vmatpush1.bf16.msra.mxu0 0
    %436 = vmatprep.subr.bf16.mxu0 0
    %437 = vmatpush1.bf16.msra.mxu0 %v262
    %438 = vmatprep.subr.bf16.mxu0 0
    %439 = vmatpush1.bf16.msra.mxu0 %v261
    %440 = vmatprep.subr.bf16.mxu0 0
    %441 = vmatpush2.bf16.msra.mxu0 0
    %442 = vmatprep.subr.bf16.mxu0 0
    %443 = vmatpush2.bf16.msra.mxu0 0
    %444 = vmatprep.subr.bf16.mxu0 0
    %445 = vmatpush2.bf16.msra.mxu0 0
    %446 = vmatprep.subr.bf16.mxu0 0
    %447 = vmatpush2.bf16.msra.mxu0 0
    %448 = vmatprep.subr.bf16.mxu0 0
    %449 = vmatpush2.bf16.msra.mxu0 0
    %450 = vmatprep.subr.bf16.mxu0 0
    %451 = vmatpush2.bf16.msra.mxu0 0
    %452 = vmatprep.subr.bf16.mxu0 0
    %453 = vmatpush2.bf16.msra.mxu0 0
    %454 = vmatprep.subr.bf16.mxu0 0
    %455 = vmatpush2.bf16.msra.mxu0 0
    %456 = vmatprep.mubr.bf16.mxu0 0
    %457 = vmatmul.mubr.bf16.gmra.mxu0 %v401
    %v458 = vpop.f32.mrf.mxu0
    %v459 = vadd.f32 %v282, %v458
    %v460 = vpop.f32.mrf.mxu0
    %v461 = vpop.f32.mrf.mxu0
    %v462 = vadd.f32 %v287, %v461
    %v463 = vpop.f32.mrf.mxu0
    %464 = vmatprep.mubr.bf16.mxu0 0
    %465 = vmatmul.mubr.bf16.gmra.mxu0 %v404
    %v466 = vpop.f32.mrf.mxu0
    %v467 = vadd.f32 %v292, %v466
    %v468 = vpop.f32.mrf.mxu0
    %v469 = vpop.f32.mrf.mxu0
    %v470 = vadd.f32 %v297, %v469
    %v471 = vpop.f32.mrf.mxu0
    %472 = vmatprep.mubr.bf16.mxu0 0
    %473 = vmatmul.mubr.bf16.gmra.mxu0 %v407
    %v474 = vpop.f32.mrf.mxu0
    %v475 = vadd.f32 %v302, %v474
    %v476 = vpop.f32.mrf.mxu0
    %v477 = vpop.f32.mrf.mxu0
    %v478 = vadd.f32 %v307, %v477
    %v479 = vpop.f32.mrf.mxu0
    %480 = vmatprep.mubr.bf16.mxu0 0
    %481 = vmatmul.mubr.bf16.gmra.mxu0 %v410
    %v482 = vpop.f32.mrf.mxu0
    %v483 = vadd.f32 %v312, %v482
    %v484 = vpop.f32.mrf.mxu0
    %v485 = vpop.f32.mrf.mxu0
    %v486 = vadd.f32 %v317, %v485
    %v487 = vpop.f32.mrf.mxu0
    %488 = vmatprep.mubr.bf16.mxu0 0
    %489 = vmatmul.mubr.bf16.gmra.mxu0 %v413
    %v490 = vpop.f32.mrf.mxu0
    %v491 = vadd.f32 %v322, %v490
    %v492 = vpop.f32.mrf.mxu0
    %v493 = vpop.f32.mrf.mxu0
    %v494 = vadd.f32 %v327, %v493
    %v495 = vpop.f32.mrf.mxu0
    %496 = vmatprep.mubr.bf16.mxu0 0
    %497 = vmatmul.mubr.bf16.gmra.mxu0 %v416
    %v498 = vpop.f32.mrf.mxu0
    %v499 = vadd.f32 %v332, %v498
    %v500 = vpop.f32.mrf.mxu0
    %v501 = vpop.f32.mrf.mxu0
    %v502 = vadd.f32 %v337, %v501
    %v503 = vpop.f32.mrf.mxu0
    %504 = vmatprep.mubr.bf16.mxu0 0
    %505 = vmatmul.mubr.bf16.gmra.mxu0 %v419
    %v506 = vpop.f32.mrf.mxu0
    %v507 = vadd.f32 %v342, %v506
    %v508 = vpop.f32.mrf.mxu0
    %v509 = vpop.f32.mrf.mxu0
    %v510 = vadd.f32 %v347, %v509
    %v511 = vpop.f32.mrf.mxu0
    %512 = vmatprep.mubr.bf16.mxu0 0
    %513 = vmatmul.mubr.bf16.gmra.mxu0 %v422
    %v514 = vpop.f32.mrf.mxu0
    %v515 = vadd.f32 %v352, %v514
    %v516 = vpop.f32.mrf.mxu0
    %v517 = vpop.f32.mrf.mxu0
    %v518 = vadd.f32 %v357, %v517
    %v519 = vpop.f32.mrf.mxu0
    %520 = vdwg.mxu0
    %v521 = vmax.f32 %v459, 0.0
    %v522 = vmax.f32 %v462, 0.0
    %v523 = vmax.f32 %v467, 0.0
    %v524 = vmax.f32 %v470, 0.0
    %v525 = vmax.f32 %v475, 0.0
    %v526 = vmax.f32 %v478, 0.0
    %v527 = vmax.f32 %v483, 0.0
    %v528 = vmax.f32 %v486, 0.0
    %v529 = vmax.f32 %v491, 0.0
    %v530 = vmax.f32 %v494, 0.0
    %v531 = vmax.f32 %v499, 0.0
    %v532 = vmax.f32 %v502, 0.0
    %v533 = vmax.f32 %v507, 0.0
    %v534 = vmax.f32 %v510, 0.0
    %v535 = vmax.f32 %v515, 0.0
    %v536 = vmax.f32 %v518, 0.0
    %v537 = vld [vmem:[%s9] sm:$0xf]
    %v538 = vld [vmem:[%s9 + $0x4] sm:$0xf]
    %v539 = vld [vmem:[%s9 + $0x8] sm:$0xf]
    %v540 = vld [vmem:[%s9 + $0xc] sm:$0xf]
    %v541 = vpack.c.bf16 %v522, %v521
    %v542 = vpack.c.bf16 %v524, %v523
    %v543 = vpack.c.bf16 %v526, %v525
    %v544 = vpack.c.bf16 %v528, %v527
    %v545 = vpack.c.bf16 %v530, %v529
    %v546 = vpack.c.bf16 %v532, %v531
    %v547 = vpack.c.bf16 %v534, %v533
    %v548 = vpack.c.bf16 %v536, %v535
    %v549 = vld [vmem:[%s10] sm:$0xff]
    %v550 = vld [vmem:[%s10 + $0x8] sm:$0xff]
    %v551 = vld [vmem:[%s10 + $0x10] sm:$0xff]
    %v552 = vld [vmem:[%s10 + $0x18] sm:$0xff]
    %554 = vset.pattern.permute.xlu0 0
    %555 = vperm.xlu0 %554, %v549
    %v556 = vpop.permute.xlu0 %555
    %559 = vset.pattern.permute.xlu0 0
    %560 = vperm.xlu0 %559, %v550
    %v561 = vpop.permute.xlu0 %560
    %564 = vset.pattern.permute.xlu0 0
    %565 = vperm.xlu0 %564, %v551
    %v566 = vpop.permute.xlu0 %565
    %569 = vset.pattern.permute.xlu0 0
    %570 = vperm.xlu0 %569, %v552
    %v571 = vpop.permute.xlu0 %570
    %v577 = vunpack.c.l.b16 %v537
    %v578 = vunpack.c.l.b16 %v538
    %v579 = vunpack.c.l.b16 %v539
    %v580 = vunpack.c.l.b16 %v540
    %v581 = vpack.c.b16 %v578, %v577
    %v582 = vpack.c.b16 %v580, %v579
    %585 = vmatprep.subr.bf16.mxu0 0
    %586 = vmatpush1.bf16.msra.mxu0 %v548
    %587 = vmatprep.subr.bf16.mxu0 0
    %588 = vmatpush1.bf16.msra.mxu0 %v547
    %589 = vmatprep.subr.bf16.mxu0 0
    %590 = vmatpush1.bf16.msra.mxu0 %v546
    %591 = vmatprep.subr.bf16.mxu0 0
    %592 = vmatpush1.bf16.msra.mxu0 %v545
    %593 = vmatprep.subr.bf16.mxu0 0
    %594 = vmatpush1.bf16.msra.mxu0 %v544
    %595 = vmatprep.subr.bf16.mxu0 0
    %596 = vmatpush1.bf16.msra.mxu0 %v543
    %597 = vmatprep.subr.bf16.mxu0 0
    %598 = vmatpush1.bf16.msra.mxu0 %v542
    %599 = vmatprep.subr.bf16.mxu0 0
    %600 = vmatpush1.bf16.msra.mxu0 %v541
    %601 = vmatprep.subr.bf16.mxu0 0
    %602 = vmatpush2.bf16.msra.mxu0 0
    %603 = vmatprep.subr.bf16.mxu0 0
    %604 = vmatpush2.bf16.msra.mxu0 0
    %605 = vmatprep.subr.bf16.mxu0 0
    %606 = vmatpush2.bf16.msra.mxu0 0
    %607 = vmatprep.subr.bf16.mxu0 0
    %608 = vmatpush2.bf16.msra.mxu0 0
    %609 = vmatprep.subr.bf16.mxu0 0
    %610 = vmatpush2.bf16.msra.mxu0 0
    %611 = vmatprep.subr.bf16.mxu0 0
    %612 = vmatpush2.bf16.msra.mxu0 0
    %613 = vmatprep.subr.bf16.mxu0 0
    %614 = vmatpush2.bf16.msra.mxu0 0
    %615 = vmatprep.subr.bf16.mxu0 0
    %616 = vmatpush2.bf16.msra.mxu0 0
    %617 = vmatprep.mubr.bf16.mxu0 0
    %618 = vmatmul.mubr.bf16.gmra.mxu0 %v581
    %v619 = vpop.f32.mrf.mxu0
    %v620 = vadd.f32 %v556, %v619
    %v621 = vpop.f32.mrf.mxu0
    %v622 = vpop.f32.mrf.mxu0
    %v623 = vadd.f32 %v561, %v622
    %v624 = vpop.f32.mrf.mxu0
    %625 = vmatprep.mubr.bf16.mxu0 0
    %626 = vmatmul.mubr.bf16.gmra.mxu0 %v582
    %v627 = vpop.f32.mrf.mxu0
    %v628 = vadd.f32 %v566, %v627
    %v629 = vpop.f32.mrf.mxu0
    %v630 = vpop.f32.mrf.mxu0
    %v631 = vadd.f32 %v571, %v630
    %v632 = vpop.f32.mrf.mxu0
    %633 = vdwg.mxu0
    %v634 = vadd.f32 %v241, %v620
    %v635 = vadd.f32 %v242, %v623
    %v636 = vadd.f32 %v243, %v628
    %v637 = vadd.f32 %v244, %v631
    %v638 = vld [vmem:[%s11] sm:$0xff]
    %v639 = vld [vmem:[%s11 + $0x8] sm:$0xff]
    %v640 = vld [vmem:[%s11 + $0x10] sm:$0xff]
    %v641 = vld [vmem:[%s11 + $0x18] sm:$0xff]
    %v642 = vld [vmem:[%s12] sm:$0xff]
    %v643 = vld [vmem:[%s12 + $0x8] sm:$0xff]
    %v644 = vld [vmem:[%s12 + $0x10] sm:$0xff]
    %v645 = vld [vmem:[%s12 + $0x18] sm:$0xff]
    %v646 = vadd.f32 %v634, %v635
    %v647 = vadd.f32 %v646, %v636
    %v648 = vadd.f32 %v647, %v637
    %v649 = vrot.slane %v648, 4
    %v650 = vadd.f32 %v648, %v649
    %v651 = vrot.slane %v650, 2
    %v652 = vadd.f32 %v650, %v651
    %v653 = vrot.slane %v652, 1
    %v654 = vadd.f32 %v652, %v653
    %v655 = vmul.f32 %v634, %v634
    %v656 = vmul.f32 %v635, %v635
    %v657 = vmul.f32 %v636, %v636
    %v658 = vmul.f32 %v637, %v637
    %v659 = vadd.f32 %v655, %v656
    %v660 = vadd.f32 %v659, %v657
    %v661 = vadd.f32 %v660, %v658
    %v662 = vrot.slane %v661, 4
    %v663 = vadd.f32 %v661, %v662
    %v664 = vrot.slane %v663, 2
    %v665 = vadd.f32 %v663, %v664
    %v666 = vrot.slane %v665, 1
    %v667 = vadd.f32 %v665, %v666
    %v668 = vmul.f32 %v654, 0.03125
    %v669 = vmul.f32 %v667, 0.03125
    %v670 = vmul.f32 %v668, %v668
    %v671 = vsub.f32 %v669, %v670
    %v672 = vsub.f32 %v634, %v668
    %v673 = vsub.f32 %v635, %v668
    %v674 = vsub.f32 %v636, %v668
    %v675 = vsub.f32 %v637, %v668
    %v676 = vadd.f32 %v671, 1e-05
    %v677 = vrsqrt.pop %v676
    %v678 = vmul.f32 %v672, %v677
    %v679 = vmul.f32 %v673, %v677
    %v680 = vmul.f32 %v674, %v677
    %v681 = vmul.f32 %v675, %v677
    %683 = vset.pattern.permute.xlu0 0
    %684 = vperm.xlu0 %683, %v638
    %v685 = vpop.permute.xlu0 %684
    %688 = vset.pattern.permute.xlu0 0
    %689 = vperm.xlu0 %688, %v639
    %v690 = vpop.permute.xlu0 %689
    %693 = vset.pattern.permute.xlu0 0
    %694 = vperm.xlu0 %693, %v640
    %v695 = vpop.permute.xlu0 %694
    %698 = vset.pattern.permute.xlu0 0
    %699 = vperm.xlu0 %698, %v641
    %v700 = vpop.permute.xlu0 %699
    %v702 = vmul.f32 %v678, %v685
    %v703 = vmul.f32 %v679, %v690
    %v704 = vmul.f32 %v680, %v695
    %v705 = vmul.f32 %v681, %v700
    %707 = vset.pattern.permute.xlu0 0
    %708 = vperm.xlu0 %707, %v642
    %v709 = vpop.permute.xlu0 %708
    %712 = vset.pattern.permute.xlu0 0
    %713 = vperm.xlu0 %712, %v643
    %v714 = vpop.permute.xlu0 %713
    %717 = vset.pattern.permute.xlu0 0
    %718 = vperm.xlu0 %717, %v644
    %v719 = vpop.permute.xlu0 %718
    %722 = vset.pattern.permute.xlu0 0
    %723 = vperm.xlu0 %722, %v645
    %v724 = vpop.permute.xlu0 %723
    %v726 = vadd.f32 %v702, %v709
    %v727 = vadd.f32 %v703, %v714
    %v728 = vadd.f32 %v704, %v719
    %v729 = vadd.f32 %v705, %v724
    %v730 = vld [vmem:[%s3] sm:$0xf]
    %v731 = vld [vmem:[%s3 + $0x4] sm:$0xf]
    %v732 = vld [vmem:[%s3 + $0x8] sm:$0xf]
    %v733 = vld [vmem:[%s3 + $0xc] sm:$0xf]
    %v734 = vpack.c.bf16 %v727, %v726
    %v735 = vpack.c.bf16 %v729, %v728
    %v736 = vld [vmem:[%s4] sm:$0xff]
    %v737 = vld [vmem:[%s4 + $0x8] sm:$0xff]
    %v738 = vld [vmem:[%s4 + $0x10] sm:$0xff]
    %v739 = vld [vmem:[%s4 + $0x18] sm:$0xff]
    %741 = vset.pattern.permute.xlu0 0
    %742 = vperm.xlu0 %741, %v736
    %v743 = vpop.permute.xlu0 %742
    %746 = vset.pattern.permute.xlu0 0
    %747 = vperm.xlu0 %746, %v737
    %v748 = vpop.permute.xlu0 %747
    %751 = vset.pattern.permute.xlu0 0
    %752 = vperm.xlu0 %751, %v738
    %v753 = vpop.permute.xlu0 %752
    %756 = vset.pattern.permute.xlu0 0
    %757 = vperm.xlu0 %756, %v739
    %v758 = vpop.permute.xlu0 %757
    %v764 = vunpack.c.l.b16 %v730
    %v765 = vunpack.c.l.b16 %v731
    %v766 = vunpack.c.l.b16 %v732
    %v767 = vunpack.c.l.b16 %v733
    %v768 = vpack.c.b16 %v765, %v764
    %v769 = vpack.c.b16 %v767, %v766
    %v771 = vsel %vm399, %v768, 0
    %v774 = vsel %vm399, %v769, 0
    %776 = vmatprep.subr.bf16.mxu0 0
    %777 = vmatpush1.bf16.msra.mxu0 0
    %778 = vmatprep.subr.bf16.mxu0 0
    %779 = vmatpush1.bf16.msra.mxu0 0
    %780 = vmatprep.subr.bf16.mxu0 0
    %781 = vmatpush1.bf16.msra.mxu0 0
    %782 = vmatprep.subr.bf16.mxu0 0
    %783 = vmatpush1.bf16.msra.mxu0 0
    %784 = vmatprep.subr.bf16.mxu0 0
    %785 = vmatpush1.bf16.msra.mxu0 0
    %786 = vmatprep.subr.bf16.mxu0 0
    %787 = vmatpush1.bf16.msra.mxu0 0
    %788 = vmatprep.subr.bf16.mxu0 0
    %789 = vmatpush1.bf16.msra.mxu0 %v735
    %790 = vmatprep.subr.bf16.mxu0 0
    %791 = vmatpush1.bf16.msra.mxu0 %v734
    %792 = vmatprep.subr.bf16.mxu0 0
    %793 = vmatpush2.bf16.msra.mxu0 0
    %794 = vmatprep.subr.bf16.mxu0 0
    %795 = vmatpush2.bf16.msra.mxu0 0
    %796 = vmatprep.subr.bf16.mxu0 0
    %797 = vmatpush2.bf16.msra.mxu0 0
    %798 = vmatprep.subr.bf16.mxu0 0
    %799 = vmatpush2.bf16.msra.mxu0 0
    %800 = vmatprep.subr.bf16.mxu0 0
    %801 = vmatpush2.bf16.msra.mxu0 0
    %802 = vmatprep.subr.bf16.mxu0 0
    %803 = vmatpush2.bf16.msra.mxu0 0
    %804 = vmatprep.subr.bf16.mxu0 0
    %805 = vmatpush2.bf16.msra.mxu0 0
    %806 = vmatprep.subr.bf16.mxu0 0
    %807 = vmatpush2.bf16.msra.mxu0 0
    %808 = vmatprep.mubr.bf16.mxu0 0
    %809 = vmatmul.mubr.bf16.gmra.mxu0 %v771
    %v810 = vpop.f32.mrf.mxu0
    %v811 = vadd.f32 %v743, %v810
    %v812 = vpop.f32.mrf.mxu0
    %v813 = vpop.f32.mrf.mxu0
    %v814 = vadd.f32 %v748, %v813
    %v815 = vpop.f32.mrf.mxu0
    %816 = vmatprep.mubr.bf16.mxu0 0
    %817 = vmatmul.mubr.bf16.gmra.mxu0 %v774
    %v818 = vpop.f32.mrf.mxu0
    %v819 = vadd.f32 %v753, %v818
    %v820 = vpop.f32.mrf.mxu0
    %v821 = vpop.f32.mrf.mxu0
    %v822 = vadd.f32 %v758, %v821
    %v823 = vpop.f32.mrf.mxu0
    %824 = vdwg.mxu0
    %s825 = scalar_lea.vmem %s5, 32
    %v826 = vld [vmem:[%s825] sm:$0xff]
    %v827 = vld [vmem:[%s825 + $0x8] sm:$0xff]
    %v828 = vld [vmem:[%s825 + $0x10] sm:$0xff]
    %v829 = vld [vmem:[%s825 + $0x18] sm:$0xff]
    %s830 = scalar_lea.vmem %s6, 32
    %v831 = vld [vmem:[%s830] sm:$0xff]
    %v832 = vld [vmem:[%s830 + $0x8] sm:$0xff]
    %v833 = vld [vmem:[%s830 + $0x10] sm:$0xff]
    %v834 = vld [vmem:[%s830 + $0x18] sm:$0xff]
    %v835 = vadd.f32 %v811, %v814
    %v836 = vadd.f32 %v835, %v819
    %v837 = vadd.f32 %v836, %v822
    %v838 = vrot.slane %v837, 4
    %v839 = vadd.f32 %v837, %v838
    %v840 = vrot.slane %v839, 2
    %v841 = vadd.f32 %v839, %v840
    %v842 = vrot.slane %v841, 1
    %v843 = vadd.f32 %v841, %v842
    %v844 = vmul.f32 %v811, %v811
    %v845 = vmul.f32 %v814, %v814
    %v846 = vmul.f32 %v819, %v819
    %v847 = vmul.f32 %v822, %v822
    %v848 = vadd.f32 %v844, %v845
    %v849 = vadd.f32 %v848, %v846
    %v850 = vadd.f32 %v849, %v847
    %v851 = vrot.slane %v850, 4
    %v852 = vadd.f32 %v850, %v851
    %v853 = vrot.slane %v852, 2
    %v854 = vadd.f32 %v852, %v853
    %v855 = vrot.slane %v854, 1
    %v856 = vadd.f32 %v854, %v855
    %v857 = vmul.f32 %v843, 0.03125
    %v858 = vmul.f32 %v856, 0.03125
    %v859 = vmul.f32 %v857, %v857
    %v860 = vsub.f32 %v858, %v859
    %v861 = vsub.f32 %v811, %v857
    %v862 = vsub.f32 %v814, %v857
    %v863 = vsub.f32 %v819, %v857
    %v864 = vsub.f32 %v822, %v857
    %v865 = vadd.f32 %v860, 1e-05
    %v866 = vrsqrt.pop %v865
    %v867 = vmul.f32 %v861, %v866
    %v868 = vmul.f32 %v862, %v866
    %v869 = vmul.f32 %v863, %v866
    %v870 = vmul.f32 %v864, %v866
    %872 = vset.pattern.permute.xlu0 0
    %873 = vperm.xlu0 %872, %v826
    %v874 = vpop.permute.xlu0 %873
    %877 = vset.pattern.permute.xlu0 0
    %878 = vperm.xlu0 %877, %v827
    %v879 = vpop.permute.xlu0 %878
    %882 = vset.pattern.permute.xlu0 0
    %883 = vperm.xlu0 %882, %v828
    %v884 = vpop.permute.xlu0 %883
    %887 = vset.pattern.permute.xlu0 0
    %888 = vperm.xlu0 %887, %v829
    %v889 = vpop.permute.xlu0 %888
    %v891 = vmul.f32 %v867, %v874
    %v892 = vmul.f32 %v868, %v879
    %v893 = vmul.f32 %v869, %v884
    %v894 = vmul.f32 %v870, %v889
    %896 = vset.pattern.permute.xlu0 0
    %897 = vperm.xlu0 %896, %v831
    %v898 = vpop.permute.xlu0 %897
    %901 = vset.pattern.permute.xlu0 0
    %902 = vperm.xlu0 %901, %v832
    %v903 = vpop.permute.xlu0 %902
    %906 = vset.pattern.permute.xlu0 0
    %907 = vperm.xlu0 %906, %v833
    %v908 = vpop.permute.xlu0 %907
    %911 = vset.pattern.permute.xlu0 0
    %912 = vperm.xlu0 %911, %v834
    %v913 = vpop.permute.xlu0 %912
    %v915 = vadd.f32 %v891, %v898
    %v916 = vadd.f32 %v892, %v903
    %v917 = vadd.f32 %v893, %v908
    %v918 = vadd.f32 %v894, %v913
    %s919 = scalar_lea.vmem %s7, 64
    %v920 = vld [vmem:[%s919] sm:$0xf]
    %v921 = vld [vmem:[%s919 + $0x4] sm:$0xf]
    %v922 = vld [vmem:[%s919 + $0x8] sm:$0xf]
    %v923 = vld [vmem:[%s919 + $0xc] sm:$0xf]
    %v924 = vld [vmem:[%s919 + $0x10] sm:$0xf]
    %v925 = vld [vmem:[%s919 + $0x14] sm:$0xf]
    %v926 = vld [vmem:[%s919 + $0x18] sm:$0xf]
    %v927 = vld [vmem:[%s919 + $0x1c] sm:$0xf]
    %v928 = vld [vmem:[%s919 + $0x20] sm:$0xf]
    %v929 = vld [vmem:[%s919 + $0x24] sm:$0xf]
    %v930 = vld [vmem:[%s919 + $0x28] sm:$0xf]
    %v931 = vld [vmem:[%s919 + $0x2c] sm:$0xf]
    %v932 = vld [vmem:[%s919 + $0x30] sm:$0xf]
    %v933 = vld [vmem:[%s919 + $0x34] sm:$0xf]
    %v934 = vld [vmem:[%s919 + $0x38] sm:$0xf]
    %v935 = vld [vmem:[%s919 + $0x3c] sm:$0xf]
    %v936 = vpack.c.bf16 %v916, %v915
    %v937 = vpack.c.bf16 %v918, %v917
    %s938 = scalar_lea.vmem %s8, 128
    %v939 = vld [vmem:[%s938] sm:$0xff]
    %v940 = vld [vmem:[%s938 + $0x8] sm:$0xff]
    %v941 = vld [vmem:[%s938 + $0x10] sm:$0xff]
    %v942 = vld [vmem:[%s938 + $0x18] sm:$0xff]
    %v943 = vld [vmem:[%s938 + $0x20] sm:$0xff]
    %v944 = vld [vmem:[%s938 + $0x28] sm:$0xff]
    %v945 = vld [vmem:[%s938 + $0x30] sm:$0xff]
    %v946 = vld [vmem:[%s938 + $0x38] sm:$0xff]
    %v947 = vld [vmem:[%s938 + $0x40] sm:$0xff]
    %v948 = vld [vmem:[%s938 + $0x48] sm:$0xff]
    %v949 = vld [vmem:[%s938 + $0x50] sm:$0xff]
    %v950 = vld [vmem:[%s938 + $0x58] sm:$0xff]
    %v951 = vld [vmem:[%s938 + $0x60] sm:$0xff]
    %v952 = vld [vmem:[%s938 + $0x68] sm:$0xff]
    %v953 = vld [vmem:[%s938 + $0x70] sm:$0xff]
    %v954 = vld [vmem:[%s938 + $0x78] sm:$0xff]
    %956 = vset.pattern.permute.xlu0 0
    %957 = vperm.xlu0 %956, %v939
    %v958 = vpop.permute.xlu0 %957
    %961 = vset.pattern.permute.xlu0 0
    %962 = vperm.xlu0 %961, %v940
    %v963 = vpop.permute.xlu0 %962
    %966 = vset.pattern.permute.xlu0 0
    %967 = vperm.xlu0 %966, %v941
    %v968 = vpop.permute.xlu0 %967
    %971 = vset.pattern.permute.xlu0 0
    %972 = vperm.xlu0 %971, %v942
    %v973 = vpop.permute.xlu0 %972
    %976 = vset.pattern.permute.xlu0 0
    %977 = vperm.xlu0 %976, %v943
    %v978 = vpop.permute.xlu0 %977
    %981 = vset.pattern.permute.xlu0 0
    %982 = vperm.xlu0 %981, %v944
    %v983 = vpop.permute.xlu0 %982
    %986 = vset.pattern.permute.xlu0 0
    %987 = vperm.xlu0 %986, %v945
    %v988 = vpop.permute.xlu0 %987
    %991 = vset.pattern.permute.xlu0 0
    %992 = vperm.xlu0 %991, %v946
    %v993 = vpop.permute.xlu0 %992
    %996 = vset.pattern.permute.xlu0 0
    %997 = vperm.xlu0 %996, %v947
    %v998 = vpop.permute.xlu0 %997
    %1001 = vset.pattern.permute.xlu0 0
    %1002 = vperm.xlu0 %1001, %v948
    %v1003 = vpop.permute.xlu0 %1002
    %1006 = vset.pattern.permute.xlu0 0
    %1007 = vperm.xlu0 %1006, %v949
    %v1008 = vpop.permute.xlu0 %1007
    %1011 = vset.pattern.permute.xlu0 0
    %1012 = vperm.xlu0 %1011, %v950
    %v1013 = vpop.permute.xlu0 %1012
    %1016 = vset.pattern.permute.xlu0 0
    %1017 = vperm.xlu0 %1016, %v951
    %v1018 = vpop.permute.xlu0 %1017
    %1021 = vset.pattern.permute.xlu0 0
    %1022 = vperm.xlu0 %1021, %v952
    %v1023 = vpop.permute.xlu0 %1022
    %1026 = vset.pattern.permute.xlu0 0
    %1027 = vperm.xlu0 %1026, %v953
    %v1028 = vpop.permute.xlu0 %1027
    %1031 = vset.pattern.permute.xlu0 0
    %1032 = vperm.xlu0 %1031, %v954
    %v1033 = vpop.permute.xlu0 %1032
    %v1051 = vunpack.c.l.b16 %v920
    %v1052 = vunpack.c.l.b16 %v921
    %v1053 = vunpack.c.l.b16 %v922
    %v1054 = vunpack.c.l.b16 %v923
    %v1055 = vunpack.c.l.b16 %v924
    %v1056 = vunpack.c.l.b16 %v925
    %v1057 = vunpack.c.l.b16 %v926
    %v1058 = vunpack.c.l.b16 %v927
    %v1059 = vunpack.c.l.b16 %v928
    %v1060 = vunpack.c.l.b16 %v929
    %v1061 = vunpack.c.l.b16 %v930
    %v1062 = vunpack.c.l.b16 %v931
    %v1063 = vunpack.c.l.b16 %v932
    %v1064 = vunpack.c.l.b16 %v933
    %v1065 = vunpack.c.l.b16 %v934
    %v1066 = vunpack.c.l.b16 %v935
    %v1067 = vpack.c.b16 %v1052, %v1051
    %v1068 = vpack.c.b16 %v1054, %v1053
    %v1069 = vpack.c.b16 %v1056, %v1055
    %v1070 = vpack.c.b16 %v1058, %v1057
    %v1071 = vpack.c.b16 %v1060, %v1059
    %v1072 = vpack.c.b16 %v1062, %v1061
    %v1073 = vpack.c.b16 %v1064, %v1063
    %v1074 = vpack.c.b16 %v1066, %v1065
    %v1076 = vsel %vm399, %v1067, 0
    %v1079 = vsel %vm399, %v1068, 0
    %v1082 = vsel %vm399, %v1069, 0
    %v1085 = vsel %vm399, %v1070, 0
    %v1088 = vsel %vm399, %v1071, 0
    %v1091 = vsel %vm399, %v1072, 0
    %v1094 = vsel %vm399, %v1073, 0
    %v1097 = vsel %vm399, %v1074, 0
    %1099 = vmatprep.subr.bf16.mxu0 0
    %1100 = vmatpush1.bf16.msra.mxu0 0
    %1101 = vmatprep.subr.bf16.mxu0 0
    %1102 = vmatpush1.bf16.msra.mxu0 0
    %1103 = vmatprep.subr.bf16.mxu0 0
    %1104 = vmatpush1.bf16.msra.mxu0 0
    %1105 = vmatprep.subr.bf16.mxu0 0
    %1106 = vmatpush1.bf16.msra.mxu0 0
    %1107 = vmatprep.subr.bf16.mxu0 0
    %1108 = vmatpush1.bf16.msra.mxu0 0
    %1109 = vmatprep.subr.bf16.mxu0 0
    %1110 = vmatpush1.bf16.msra.mxu0 0
    %1111 = vmatprep.subr.bf16.mxu0 0
    %1112 = vmatpush1.bf16.msra.mxu0 %v937
    %1113 = vmatprep.subr.bf16.mxu0 0
    %1114 = vmatpush1.bf16.msra.mxu0 %v936
    %1115 = vmatprep.subr.bf16.mxu0 0
    %1116 = vmatpush2.bf16.msra.mxu0 0
    %1117 = vmatprep.subr.bf16.mxu0 0
    %1118 = vmatpush2.bf16.msra.mxu0 0
    %1119 = vmatprep.subr.bf16.mxu0 0
    %1120 = vmatpush2.bf16.msra.mxu0 0
    %1121 = vmatprep.subr.bf16.mxu0 0
    %1122 = vmatpush2.bf16.msra.mxu0 0
    %1123 = vmatprep.subr.bf16.mxu0 0
    %1124 = vmatpush2.bf16.msra.mxu0 0
    %1125 = vmatprep.subr.bf16.mxu0 0
    %1126 = vmatpush2.bf16.msra.mxu0 0
    %1127 = vmatprep.subr.bf16.mxu0 0
    %1128 = vmatpush2.bf16.msra.mxu0 0
    %1129 = vmatprep.subr.bf16.mxu0 0
    %1130 = vmatpush2.bf16.msra.mxu0 0
    %1131 = vmatprep.mubr.bf16.mxu0 0
    %1132 = vmatmul.mubr.bf16.gmra.mxu0 %v1076
    %v1133 = vpop.f32.mrf.mxu0
    %v1134 = vadd.f32 %v958, %v1133
    %v1135 = vpop.f32.mrf.mxu0
    %v1136 = vpop.f32.mrf.mxu0
    %v1137 = vadd.f32 %v963, %v1136
    %v1138 = vpop.f32.mrf.mxu0
    %1139 = vmatprep.mubr.bf16.mxu0 0
    %1140 = vmatmul.mubr.bf16.gmra.mxu0 %v1079
    %v1141 = vpop.f32.mrf.mxu0
    %v1142 = vadd.f32 %v968, %v1141
    %v1143 = vpop.f32.mrf.mxu0
    %v1144 = vpop.f32.mrf.mxu0
    %v1145 = vadd.f32 %v973, %v1144
    %v1146 = vpop.f32.mrf.mxu0
    %1147 = vmatprep.mubr.bf16.mxu0 0
    %1148 = vmatmul.mubr.bf16.gmra.mxu0 %v1082
    %v1149 = vpop.f32.mrf.mxu0
    %v1150 = vadd.f32 %v978, %v1149
    %v1151 = vpop.f32.mrf.mxu0
    %v1152 = vpop.f32.mrf.mxu0
    %v1153 = vadd.f32 %v983, %v1152
    %v1154 = vpop.f32.mrf.mxu0
    %1155 = vmatprep.mubr.bf16.mxu0 0
    %1156 = vmatmul.mubr.bf16.gmra.mxu0 %v1085
    %v1157 = vpop.f32.mrf.mxu0
    %v1158 = vadd.f32 %v988, %v1157
    %v1159 = vpop.f32.mrf.mxu0
    %v1160 = vpop.f32.mrf.mxu0
    %v1161 = vadd.f32 %v993, %v1160
    %v1162 = vpop.f32.mrf.mxu0
    %1163 = vmatprep.mubr.bf16.mxu0 0
    %1164 = vmatmul.mubr.bf16.gmra.mxu0 %v1088
    %v1165 = vpop.f32.mrf.mxu0
    %v1166 = vadd.f32 %v998, %v1165
    %v1167 = vpop.f32.mrf.mxu0
    %v1168 = vpop.f32.mrf.mxu0
    %v1169 = vadd.f32 %v1003, %v1168
    %v1170 = vpop.f32.mrf.mxu0
    %1171 = vmatprep.mubr.bf16.mxu0 0
    %1172 = vmatmul.mubr.bf16.gmra.mxu0 %v1091
    %v1173 = vpop.f32.mrf.mxu0
    %v1174 = vadd.f32 %v1008, %v1173
    %v1175 = vpop.f32.mrf.mxu0
    %v1176 = vpop.f32.mrf.mxu0
    %v1177 = vadd.f32 %v1013, %v1176
    %v1178 = vpop.f32.mrf.mxu0
    %1179 = vmatprep.mubr.bf16.mxu0 0
    %1180 = vmatmul.mubr.bf16.gmra.mxu0 %v1094
    %v1181 = vpop.f32.mrf.mxu0
    %v1182 = vadd.f32 %v1018, %v1181
    %v1183 = vpop.f32.mrf.mxu0
    %v1184 = vpop.f32.mrf.mxu0
    %v1185 = vadd.f32 %v1023, %v1184
    %v1186 = vpop.f32.mrf.mxu0
    %1187 = vmatprep.mubr.bf16.mxu0 0
    %1188 = vmatmul.mubr.bf16.gmra.mxu0 %v1097
    %v1189 = vpop.f32.mrf.mxu0
    %v1190 = vadd.f32 %v1028, %v1189
    %v1191 = vpop.f32.mrf.mxu0
    %v1192 = vpop.f32.mrf.mxu0
    %v1193 = vadd.f32 %v1033, %v1192
    %v1194 = vpop.f32.mrf.mxu0
    %1195 = vdwg.mxu0
    %v1196 = vmax.f32 %v1134, 0.0
    %v1197 = vmax.f32 %v1137, 0.0
    %v1198 = vmax.f32 %v1142, 0.0
    %v1199 = vmax.f32 %v1145, 0.0
    %v1200 = vmax.f32 %v1150, 0.0
    %v1201 = vmax.f32 %v1153, 0.0
    %v1202 = vmax.f32 %v1158, 0.0
    %v1203 = vmax.f32 %v1161, 0.0
    %v1204 = vmax.f32 %v1166, 0.0
    %v1205 = vmax.f32 %v1169, 0.0
    %v1206 = vmax.f32 %v1174, 0.0
    %v1207 = vmax.f32 %v1177, 0.0
    %v1208 = vmax.f32 %v1182, 0.0
    %v1209 = vmax.f32 %v1185, 0.0
    %v1210 = vmax.f32 %v1190, 0.0
    %v1211 = vmax.f32 %v1193, 0.0
    %s1212 = scalar_lea.vmem %s9, 16
    %v1213 = vld [vmem:[%s1212] sm:$0xf]
    %v1214 = vld [vmem:[%s1212 + $0x4] sm:$0xf]
    %v1215 = vld [vmem:[%s1212 + $0x8] sm:$0xf]
    %v1216 = vld [vmem:[%s1212 + $0xc] sm:$0xf]
    %v1217 = vpack.c.bf16 %v1197, %v1196
    %v1218 = vpack.c.bf16 %v1199, %v1198
    %v1219 = vpack.c.bf16 %v1201, %v1200
    %v1220 = vpack.c.bf16 %v1203, %v1202
    %v1221 = vpack.c.bf16 %v1205, %v1204
    %v1222 = vpack.c.bf16 %v1207, %v1206
    %v1223 = vpack.c.bf16 %v1209, %v1208
    %v1224 = vpack.c.bf16 %v1211, %v1210
    %s1225 = scalar_lea.vmem %s10, 32
    %v1226 = vld [vmem:[%s1225] sm:$0xff]
    %v1227 = vld [vmem:[%s1225 + $0x8] sm:$0xff]
    %v1228 = vld [vmem:[%s1225 + $0x10] sm:$0xff]
    %v1229 = vld [vmem:[%s1225 + $0x18] sm:$0xff]
    %1231 = vset.pattern.permute.xlu0 0
    %1232 = vperm.xlu0 %1231, %v1226
    %v1233 = vpop.permute.xlu0 %1232
    %1236 = vset.pattern.permute.xlu0 0
    %1237 = vperm.xlu0 %1236, %v1227
    %v1238 = vpop.permute.xlu0 %1237
    %1241 = vset.pattern.permute.xlu0 0
    %1242 = vperm.xlu0 %1241, %v1228
    %v1243 = vpop.permute.xlu0 %1242
    %1246 = vset.pattern.permute.xlu0 0
    %1247 = vperm.xlu0 %1246, %v1229
    %v1248 = vpop.permute.xlu0 %1247
    %v1254 = vunpack.c.l.b16 %v1213
    %v1255 = vunpack.c.l.b16 %v1214
    %v1256 = vunpack.c.l.b16 %v1215
    %v1257 = vunpack.c.l.b16 %v1216
    %v1258 = vpack.c.b16 %v1255, %v1254
    %v1259 = vpack.c.b16 %v1257, %v1256
    %1262 = vmatprep.subr.bf16.mxu0 0
    %1263 = vmatpush1.bf16.msra.mxu0 %v1224
    %1264 = vmatprep.subr.bf16.mxu0 0
    %1265 = vmatpush1.bf16.msra.mxu0 %v1223
    %1266 = vmatprep.subr.bf16.mxu0 0
    %1267 = vmatpush1.bf16.msra.mxu0 %v1222
    %1268 = vmatprep.subr.bf16.mxu0 0
    %1269 = vmatpush1.bf16.msra.mxu0 %v1221
    %1270 = vmatprep.subr.bf16.mxu0 0
    %1271 = vmatpush1.bf16.msra.mxu0 %v1220
    %1272 = vmatprep.subr.bf16.mxu0 0
    %1273 = vmatpush1.bf16.msra.mxu0 %v1219
    %1274 = vmatprep.subr.bf16.mxu0 0
    %1275 = vmatpush1.bf16.msra.mxu0 %v1218
    %1276 = vmatprep.subr.bf16.mxu0 0
    %1277 = vmatpush1.bf16.msra.mxu0 %v1217
    %1278 = vmatprep.subr.bf16.mxu0 0
    %1279 = vmatpush2.bf16.msra.mxu0 0
    %1280 = vmatprep.subr.bf16.mxu0 0
    %1281 = vmatpush2.bf16.msra.mxu0 0
    %1282 = vmatprep.subr.bf16.mxu0 0
    %1283 = vmatpush2.bf16.msra.mxu0 0
    %1284 = vmatprep.subr.bf16.mxu0 0
    %1285 = vmatpush2.bf16.msra.mxu0 0
    %1286 = vmatprep.subr.bf16.mxu0 0
    %1287 = vmatpush2.bf16.msra.mxu0 0
    %1288 = vmatprep.subr.bf16.mxu0 0
    %1289 = vmatpush2.bf16.msra.mxu0 0
    %1290 = vmatprep.subr.bf16.mxu0 0
    %1291 = vmatpush2.bf16.msra.mxu0 0
    %1292 = vmatprep.subr.bf16.mxu0 0
    %1293 = vmatpush2.bf16.msra.mxu0 0
    %1294 = vmatprep.mubr.bf16.mxu0 0
    %1295 = vmatmul.mubr.bf16.gmra.mxu0 %v1258
    %v1296 = vpop.f32.mrf.mxu0
    %v1297 = vadd.f32 %v1233, %v1296
    %v1298 = vpop.f32.mrf.mxu0
    %v1299 = vpop.f32.mrf.mxu0
    %v1300 = vadd.f32 %v1238, %v1299
    %v1301 = vpop.f32.mrf.mxu0
    %1302 = vmatprep.mubr.bf16.mxu0 0
    %1303 = vmatmul.mubr.bf16.gmra.mxu0 %v1259
    %v1304 = vpop.f32.mrf.mxu0
    %v1305 = vadd.f32 %v1243, %v1304
    %v1306 = vpop.f32.mrf.mxu0
    %v1307 = vpop.f32.mrf.mxu0
    %v1308 = vadd.f32 %v1248, %v1307
    %v1309 = vpop.f32.mrf.mxu0
    %1310 = vdwg.mxu0
    %v1311 = vadd.f32 %v915, %v1297
    %v1312 = vadd.f32 %v916, %v1300
    %v1313 = vadd.f32 %v917, %v1305
    %v1314 = vadd.f32 %v918, %v1308
    %s1315 = scalar_lea.vmem %s11, 32
    %v1316 = vld [vmem:[%s1315] sm:$0xff]
    %v1317 = vld [vmem:[%s1315 + $0x8] sm:$0xff]
    %v1318 = vld [vmem:[%s1315 + $0x10] sm:$0xff]
    %v1319 = vld [vmem:[%s1315 + $0x18] sm:$0xff]
    %s1320 = scalar_lea.vmem %s12, 32
    %v1321 = vld [vmem:[%s1320] sm:$0xff]
    %v1322 = vld [vmem:[%s1320 + $0x8] sm:$0xff]
    %v1323 = vld [vmem:[%s1320 + $0x10] sm:$0xff]
    %v1324 = vld [vmem:[%s1320 + $0x18] sm:$0xff]
    %v1325 = vadd.f32 %v1311, %v1312
    %v1326 = vadd.f32 %v1325, %v1313
    %v1327 = vadd.f32 %v1326, %v1314
    %v1328 = vrot.slane %v1327, 4
    %v1329 = vadd.f32 %v1327, %v1328
    %v1330 = vrot.slane %v1329, 2
    %v1331 = vadd.f32 %v1329, %v1330
    %v1332 = vrot.slane %v1331, 1
    %v1333 = vadd.f32 %v1331, %v1332
    %v1334 = vmul.f32 %v1311, %v1311
    %v1335 = vmul.f32 %v1312, %v1312
    %v1336 = vmul.f32 %v1313, %v1313
    %v1337 = vmul.f32 %v1314, %v1314
    %v1338 = vadd.f32 %v1334, %v1335
    %v1339 = vadd.f32 %v1338, %v1336
    %v1340 = vadd.f32 %v1339, %v1337
    %v1341 = vrot.slane %v1340, 4
    %v1342 = vadd.f32 %v1340, %v1341
    %v1343 = vrot.slane %v1342, 2
    %v1344 = vadd.f32 %v1342, %v1343
    %v1345 = vrot.slane %v1344, 1
    %v1346 = vadd.f32 %v1344, %v1345
    %v1347 = vmul.f32 %v1333, 0.03125
    %v1348 = vmul.f32 %v1346, 0.03125
    %v1349 = vmul.f32 %v1347, %v1347
    %v1350 = vsub.f32 %v1348, %v1349
    %v1351 = vsub.f32 %v1311, %v1347
    %v1352 = vsub.f32 %v1312, %v1347
    %v1353 = vsub.f32 %v1313, %v1347
    %v1354 = vsub.f32 %v1314, %v1347
    %v1355 = vadd.f32 %v1350, 1e-05
    %v1356 = vrsqrt.pop %v1355
    %v1357 = vmul.f32 %v1351, %v1356
    %v1358 = vmul.f32 %v1352, %v1356
    %v1359 = vmul.f32 %v1353, %v1356
    %v1360 = vmul.f32 %v1354, %v1356
    %1362 = vset.pattern.permute.xlu0 0
    %1363 = vperm.xlu0 %1362, %v1316
    %v1364 = vpop.permute.xlu0 %1363
    %1367 = vset.pattern.permute.xlu0 0
    %1368 = vperm.xlu0 %1367, %v1317
    %v1369 = vpop.permute.xlu0 %1368
    %1372 = vset.pattern.permute.xlu0 0
    %1373 = vperm.xlu0 %1372, %v1318
    %v1374 = vpop.permute.xlu0 %1373
    %1377 = vset.pattern.permute.xlu0 0
    %1378 = vperm.xlu0 %1377, %v1319
    %v1379 = vpop.permute.xlu0 %1378
    %v1381 = vmul.f32 %v1357, %v1364
    %v1382 = vmul.f32 %v1358, %v1369
    %v1383 = vmul.f32 %v1359, %v1374
    %v1384 = vmul.f32 %v1360, %v1379
    %1386 = vset.pattern.permute.xlu0 0
    %1387 = vperm.xlu0 %1386, %v1321
    %v1388 = vpop.permute.xlu0 %1387
    %1391 = vset.pattern.permute.xlu0 0
    %1392 = vperm.xlu0 %1391, %v1322
    %v1393 = vpop.permute.xlu0 %1392
    %1396 = vset.pattern.permute.xlu0 0
    %1397 = vperm.xlu0 %1396, %v1323
    %v1398 = vpop.permute.xlu0 %1397
    %1401 = vset.pattern.permute.xlu0 0
    %1402 = vperm.xlu0 %1401, %v1324
    %v1403 = vpop.permute.xlu0 %1402
    %v1405 = vadd.f32 %v1381, %v1388
    %v1406 = vadd.f32 %v1382, %v1393
    %v1407 = vadd.f32 %v1383, %v1398
    %v1408 = vadd.f32 %v1384, %v1403
    %v1409 = vld [vmem:[%s13] sm:$0xf]
    %v1410 = vpack.c.bf16 %v1406, %v1405
    %v1411 = vpack.c.bf16 %v1408, %v1407
    %v1413 = vsel %vm399, %v1409, 0
    %1415 = vmatprep.subr.bf16.mxu0 0
    %1416 = vmatpush1.bf16.msra.mxu0 0
    %1417 = vmatprep.subr.bf16.mxu0 0
    %1418 = vmatpush1.bf16.msra.mxu0 0
    %1419 = vmatprep.subr.bf16.mxu0 0
    %1420 = vmatpush1.bf16.msra.mxu0 0
    %1421 = vmatprep.subr.bf16.mxu0 0
    %1422 = vmatpush1.bf16.msra.mxu0 0
    %1423 = vmatprep.subr.bf16.mxu0 0
    %1424 = vmatpush1.bf16.msra.mxu0 0
    %1425 = vmatprep.subr.bf16.mxu0 0
    %1426 = vmatpush1.bf16.msra.mxu0 0
    %1427 = vmatprep.subr.bf16.mxu0 0
    %1428 = vmatpush1.bf16.msra.mxu0 %v1411
    %1429 = vmatprep.subr.bf16.mxu0 0
    %1430 = vmatpush1.bf16.msra.mxu0 %v1410
    %1431 = vmatprep.subr.bf16.mxu0 0
    %1432 = vmatpush2.bf16.msra.mxu0 0
    %1433 = vmatprep.subr.bf16.mxu0 0
    %1434 = vmatpush2.bf16.msra.mxu0 0
    %1435 = vmatprep.subr.bf16.mxu0 0
    %1436 = vmatpush2.bf16.msra.mxu0 0
    %1437 = vmatprep.subr.bf16.mxu0 0
    %1438 = vmatpush2.bf16.msra.mxu0 0
    %1439 = vmatprep.subr.bf16.mxu0 0
    %1440 = vmatpush2.bf16.msra.mxu0 0
    %1441 = vmatprep.subr.bf16.mxu0 0
    %1442 = vmatpush2.bf16.msra.mxu0 0
    %1443 = vmatprep.subr.bf16.mxu0 0
    %1444 = vmatpush2.bf16.msra.mxu0 0
    %1445 = vmatprep.subr.bf16.mxu0 0
    %1446 = vmatpush2.bf16.msra.mxu0 0
    %1447 = vmatprep.mubr.bf16.mxu0 0
    %1448 = vmatmul.mubr.bf16.gmra.mxu0 %v1413
    %v1449 = vpop.f32.mrf.mxu0
    %v1450 = vadd.f32 0.0, %v1449
    %v1451 = vpop.f32.mrf.mxu0
    %v1452 = vpop.f32.mrf.mxu0
    %v1453 = vpop.f32.mrf.mxu0
    %1454 = vdwg.mxu0
    %s1455 = sld [smem:[#allocation2]]
    %v1456 = vstv %s1455
    %v1457 = vadd.f32 %v1450, %v1456
    %1458 = vst [vmem:[#allocation3] sm:$0x1] %v1457
    // Predicated region
    $region62: #{tpu_custom_call.1} parent=1 // pred_check
      _
    $region63: #{tpu_custom_call.1} parent=1 // pred_check_branch
      %1460 = sbr.rel (0) target = $region65
    $region64: #{tpu_custom_call.1} parent=1 // pred_region
      %s1462 = ssub.s32 16, 16
      %1463 = vsyncadd [#allocation4], %s1462
      %s1465 = sshll.u32 [#allocation3], 4
      %s1466 = int_to_ptr.vmem [resolvable:$true] %s1465
      %1468 = dma.vmem_to_hbm [thread:$0]  %s1466, 16, %s15, [#allocation4]
    $region65: #{tpu_custom_call.1} parent=1 // pred_fallthru
      _
    // Predicated region
    $region66: #{tpu_custom_call.1} parent=1 // pred_check
      _
    $region67: #{tpu_custom_call.1} parent=1 // pred_check_branch
      %1470 = sbr.rel (0) target = $region69
    $region68: #{tpu_custom_call.1} parent=1 // pred_region
      %1471 = dma.done [#allocation4], 16
    $region69: #{tpu_custom_call.1} parent=1 // pred_fallthru
      _
    %1472 = vsyncpa [#allocation4], 1

</llo_original>
